<compile_context>
chip_gen: v7x
topology: tpu7x:2x2x1
jax: 0.10.0
libtpu: 0.0.40
codegen_flags: <defaults>
</compile_context>

<pallas_src>
import jax
import jax.numpy as jnp
from jax.experimental import pallas as pl
from jax.experimental.pallas import tpu as pltpu


def gcn_logsoftmax_kernel(a_ref, x_ref, w_ref, dk_ref, di_ref, b_ref,
                          o_ref, acc_ref):
    i = pl.program_id(0)          # output row tile
    k = pl.program_id(1)          # reduction (adjacency column) tile
    nk = pl.num_programs(1)

    @pl.when(k == 0)
    def _init():
        acc_ref[...] = jnp.zeros_like(acc_ref)

    # H_k = X[k-block] @ W : (T, F) @ (F, C) -> (T, C).  Tiny; recomputed per
    # (i, k) which costs negligible MXU time vs. the adjacency DMA stream.
    h_k = jnp.dot(x_ref[...], w_ref[...], preferred_element_type=jnp.float32)
    # Fold the column normalization onto H:  G_k = D^-1/2[k-block] * H_k
    g_k = dk_ref[...] * h_k

    # Off-diagonal aggregation: A[i-block, k-block] @ G_k.
    # A streams as bf16 (0/1 values -> exact); all arithmetic stays f32.
    acc_ref[...] += jnp.dot(a_ref[...].astype(jnp.float32), g_k,
                            preferred_element_type=jnp.float32)

    # Self-loop term (the I in A + I) lives on the diagonal block (TM == TK).
    @pl.when(k == i)
    def _self_loop():
        acc_ref[...] += g_k

    # Finalize: row normalization, bias, log_softmax over the class dim.
    @pl.when(k == nk - 1)
    def _finalize():
        z = di_ref[...] * acc_ref[...] + b_ref[...]
        m = jnp.max(z, axis=-1, keepdims=True)
        s = z - m
        lse = jnp.log(jnp.sum(jnp.exp(s), axis=-1, keepdims=True))
        o_ref[...] = (s - lse).astype(o_ref.dtype)


def _pick_tile(n):
    # Largest tile that keeps double-buffered bf16 A blocks comfortably inside
    # the 32 MiB scoped-VMEM default on all generations (incl. v7x's 64 MiB
    # physical VMEM): 512^2 bf16 double-buffered = 1 MiB.
    for t in (512, 256, 128):
        if n % t == 0:
            return t
    return n  # small / odd-sized graphs: single full-array block


def simple_model01_forward(adj_mat, x, w, b, *, tile=None):
    """Dense GCNConv + log_softmax, fused normalization, tiled Pallas kernel."""
    n, f = x.shape
    c = w.shape[1]
    t = tile if tile is not None else _pick_tile(n)
    assert n % t == 0, "num_nodes must be divisible by the tile size"

    # --- glue: degree (incl. self-loop) -> D^-1/2 vector.  One pass over A;
    # unavoidable (column scaling needs all degrees before the first A tile).
    deg = jnp.sum(adj_mat.astype(jnp.float32), axis=1) + 1.0
    d_inv_sqrt = (1.0 / jnp.sqrt(deg)).astype(jnp.float32).reshape(n, 1)

    # Raw 0/1 adjacency in bf16: exact, halves HBM traffic on the dominant stream.
    a_bf16 = adj_mat.astype(jnp.bfloat16)
    x32 = x.astype(jnp.float32)
    w32 = w.astype(jnp.float32)
    b2 = b.reshape(1, c).astype(jnp.float32)

    grid = (n // t, n // t)

    return pl.pallas_call(
        gcn_logsoftmax_kernel,
        out_shape=jax.ShapeDtypeStruct((n, c), jnp.float32),
        grid_spec=pltpu.PrefetchScalarGridSpec(
            num_scalar_prefetch=0,
            grid=grid,
            in_specs=[
                pl.BlockSpec((t, t), lambda i, k: (i, k)),   # A tile (bf16)
                pl.BlockSpec((t, f), lambda i, k: (k, 0)),   # X rows of k block
                pl.BlockSpec((f, c), lambda i, k: (0, 0)),   # W (resident)
                pl.BlockSpec((t, 1), lambda i, k: (k, 0)),   # D^-1/2, k block
                pl.BlockSpec((t, 1), lambda i, k: (i, 0)),   # D^-1/2, i block
                pl.BlockSpec((1, c), lambda i, k: (0, 0)),   # bias (resident)
            ],
            out_specs=pl.BlockSpec((t, c), lambda i, k: (i, 0)),
            scratch_shapes=[pltpu.VMEM((t, c), jnp.float32)],
        ),
        compiler_params=pltpu.CompilerParams(
            dimension_semantics=("parallel", "arbitrary"),
        ),
    )(a_bf16, x32, w32, d_inv_sqrt, d_inv_sqrt, b2)


def reference_forward(adj_mat, x, w, b):
    """Pure-JAX f32 reference for sanity checking."""
    n = x.shape[0]
    a_hat = adj_mat.astype(jnp.float32) + jnp.eye(n, dtype=jnp.float32)
    deg = jnp.sum(a_hat, axis=1)
    d_inv_sqrt = jnp.where(deg > 0, 1.0 / jnp.sqrt(deg), 0.0)
    a_norm = d_inv_sqrt[:, None] * a_hat * d_inv_sqrt[None, :]
    h = jnp.dot(x, w, precision=jax.lax.Precision.HIGHEST)
    z = jnp.dot(a_norm, h, precision=jax.lax.Precision.HIGHEST) + b[None, :]
    return jax.nn.log_softmax(z, axis=1)


if __name__ == "__main__":
    key = jax.random.PRNGKey(0)
    k_adj, k_x, k_w, k_b = jax.random.split(key, 4)

    num_nodes = 256    # N
    input_dim = 16     # F
    output_dim = 2     # C (GCNConv output_dim default)
    tile = 128         # grid (2, 2): exercises accumulate / self-loop / finalize

    # Deterministic symmetric 0/1 adjacency (no self loops; GCNConv adds them).
    upper = (jax.random.uniform(k_adj, (num_nodes, num_nodes)) > 0.7).astype(jnp.float32)
    adj = jnp.triu(upper, k=1)
    adj = adj + adj.T

    # Node features and GCNConv parameters (Glorot-style weight, small bias).
    x = jax.random.normal(k_x, (num_nodes, input_dim), dtype=jnp.float32)
    limit = (6.0 / (input_dim + output_dim)) ** 0.5
    w = jax.random.uniform(k_w, (input_dim, output_dim),
                           minval=-limit, maxval=limit, dtype=jnp.float32)
    b = 0.01 * jax.random.normal(k_b, (output_dim,), dtype=jnp.float32)

    out = simple_model01_forward(adj, x, w, b, tile=tile)
    out = jax.block_until_ready(out)

    ref = reference_forward(adj, x, w, b)
    assert out.shape == (num_nodes, output_dim)
    assert jnp.allclose(out, ref, atol=1e-4, rtol=1e-4), "mismatch vs JAX reference"

    print("KERNEL_OK")
</pallas_src>

<mosaic_0001>
module attributes {stable_mosaic.version = 11 : i64} {
  func.func @gcn_logsoftmax_kernel(%arg0: i32, %arg1: i32, %arg2: memref<128x128xbf16, #tpu.memory_space<vmem>>, %arg3: memref<128x16xf32, #tpu.memory_space<vmem>>, %arg4: memref<16x2xf32, #tpu.memory_space<vmem>>, %arg5: memref<128x1xf32, #tpu.memory_space<vmem>>, %arg6: memref<128x1xf32, #tpu.memory_space<vmem>>, %arg7: memref<1x2xf32, #tpu.memory_space<vmem>>, %arg8: memref<128x2xf32, #tpu.memory_space<vmem>>, %arg9: memref<128x2xf32, #tpu.memory_space<vmem>>) attributes {dimension_semantics = [#tpu.dimension_semantics<parallel>, #tpu.dimension_semantics<arbitrary>], iteration_bounds = array<i64: 2, 2>, scalar_prefetch = 0 : i64, scratch_operands = 1 : i64, tpu.core_type = #tpu.core_type<tc>, window_params = [{transform_indices = @transform_0, window_bounds = array<i64: 128, 128>}, {transform_indices = @transform_1, window_bounds = array<i64: 128, 16>}, {pipeline_mode = #tpu.pipeline_mode<synchronous>, transform_indices = @transform_2, window_bounds = array<i64: 16, 2>}, {transform_indices = @transform_3, window_bounds = array<i64: 128, 1>}, {transform_indices = @transform_4, window_bounds = array<i64: 128, 1>}, {pipeline_mode = #tpu.pipeline_mode<synchronous>, transform_indices = @transform_5, window_bounds = array<i64: 1, 2>}, {transform_indices = @transform_6, window_bounds = array<i64: 128, 2>}]} {
    %c0_i32 = arith.constant 0 : i32
    %0 = arith.cmpi eq, %arg1, %c0_i32 : i32
    %1 = arith.extui %0 : i1 to i32
    %c0_i32_0 = arith.constant 0 : i32
    %2 = arith.cmpi ne, %1, %c0_i32_0 : i32
    scf.if %2 {
      %cst_15 = arith.constant 0.000000e+00 : f32
      %21 = vector.broadcast %cst_15 : f32 to vector<128x2xf32>
      %c0_16 = arith.constant 0 : index
      %c0_17 = arith.constant 0 : index
      %22 = vector.load %arg9[%c0_16, %c0_17] : memref<128x2xf32, #tpu.memory_space<vmem>>, vector<128x2xf32>
      tpu.vector_store %arg9[%c0_16, %c0_17], %21 {strides = array<i32>} : memref<128x2xf32, #tpu.memory_space<vmem>>, vector<128x2xf32>,
    } else {
    }
    %c0 = arith.constant 0 : index
    %c0_1 = arith.constant 0 : index
    %3 = vector.load %arg3[%c0, %c0_1] : memref<128x16xf32, #tpu.memory_space<vmem>>, vector<128x16xf32>
    %c0_2 = arith.constant 0 : index
    %c0_3 = arith.constant 0 : index
    %4 = vector.load %arg4[%c0_2, %c0_3] : memref<16x2xf32, #tpu.memory_space<vmem>>, vector<16x2xf32>
    %cst = arith.constant dense<0.000000e+00> : vector<128x2xf32>
    %5 = tpu.matmul %3, %4, %cst {dimension_numbers = #tpu.dot_dimension_numbers<[1], [0], [0], [1], [0, 0, 1, 1], [], []>} : vector<128x16xf32>, vector<16x2xf32>, vector<128x2xf32> -> vector<128x2xf32>
    %c0_4 = arith.constant 0 : index
    %c0_5 = arith.constant 0 : index
    %6 = vector.load %arg5[%c0_4, %c0_5] : memref<128x1xf32, #tpu.memory_space<vmem>>, vector<128x1xf32>
    %7 = vector.broadcast %6 : vector<128x1xf32> to vector<128x2xf32>
    %8 = arith.mulf %7, %5 : vector<128x2xf32>
    %c0_6 = arith.constant 0 : index
    %c0_7 = arith.constant 0 : index
    %9 = vector.load %arg9[%c0_6, %c0_7] : memref<128x2xf32, #tpu.memory_space<vmem>>, vector<128x2xf32>
    %c0_8 = arith.constant 0 : index
    %c0_9 = arith.constant 0 : index
    %10 = vector.load %arg2[%c0_8, %c0_9] : memref<128x128xbf16, #tpu.memory_space<vmem>>, vector<128x128xbf16>
    %11 = arith.extf %10 : vector<128x128xbf16> to vector<128x128xf32>
    %cst_10 = arith.constant dense<0.000000e+00> : vector<128x2xf32>
    %12 = tpu.matmul %11, %8, %cst_10 {dimension_numbers = #tpu.dot_dimension_numbers<[1], [0], [0], [1], [0, 0, 1, 1], [], []>} : vector<128x128xf32>, vector<128x2xf32>, vector<128x2xf32> -> vector<128x2xf32>
    %13 = arith.addf %9, %12 : vector<128x2xf32>
    %c0_11 = arith.constant 0 : index
    %c0_12 = arith.constant 0 : index
    %14 = vector.load %arg9[%c0_11, %c0_12] : memref<128x2xf32, #tpu.memory_space<vmem>>, vector<128x2xf32>
    tpu.vector_store %arg9[%c0_11, %c0_12], %13 {strides = array<i32>} : memref<128x2xf32, #tpu.memory_space<vmem>>, vector<128x2xf32>,
    %15 = arith.cmpi eq, %arg1, %arg0 : i32
    %16 = arith.extui %15 : i1 to i32
    %c0_i32_13 = arith.constant 0 : i32
    %17 = arith.cmpi ne, %16, %c0_i32_13 : i32
    scf.if %17 {
      %c0_15 = arith.constant 0 : index
      %c0_16 = arith.constant 0 : index
      %21 = vector.load %arg9[%c0_15, %c0_16] : memref<128x2xf32, #tpu.memory_space<vmem>>, vector<128x2xf32>
      %22 = arith.addf %21, %8 : vector<128x2xf32>
      %c0_17 = arith.constant 0 : index
      %c0_18 = arith.constant 0 : index
      %23 = vector.load %arg9[%c0_17, %c0_18] : memref<128x2xf32, #tpu.memory_space<vmem>>, vector<128x2xf32>
      tpu.vector_store %arg9[%c0_17, %c0_18], %22 {strides = array<i32>} : memref<128x2xf32, #tpu.memory_space<vmem>>, vector<128x2xf32>,
    } else {
    }
    %c1_i32 = arith.constant 1 : i32
    %18 = arith.cmpi eq, %arg1, %c1_i32 : i32
    %19 = arith.extui %18 : i1 to i32
    %c0_i32_14 = arith.constant 0 : i32
    %20 = arith.cmpi ne, %19, %c0_i32_14 : i32
    scf.if %20 {
      %c0_15 = arith.constant 0 : index
      %c0_16 = arith.constant 0 : index
      %21 = vector.load %arg6[%c0_15, %c0_16] : memref<128x1xf32, #tpu.memory_space<vmem>>, vector<128x1xf32>
      %c0_17 = arith.constant 0 : index
      %c0_18 = arith.constant 0 : index
      %22 = vector.load %arg9[%c0_17, %c0_18] : memref<128x2xf32, #tpu.memory_space<vmem>>, vector<128x2xf32>
      %23 = vector.broadcast %21 : vector<128x1xf32> to vector<128x2xf32>
      %24 = arith.mulf %23, %22 : vector<128x2xf32>
      %c0_19 = arith.constant 0 : index
      %c0_20 = arith.constant 0 : index
      %25 = vector.load %arg7[%c0_19, %c0_20] : memref<1x2xf32, #tpu.memory_space<vmem>>, vector<1x2xf32>
      %26 = vector.broadcast %25 : vector<1x2xf32> to vector<128x2xf32>
      %27 = arith.addf %24, %26 : vector<128x2xf32>
      %cst_21 = arith.constant dense<0xFF800000> : vector<128xf32>
      %28 = vector.multi_reduction <maximumf>, %27, %cst_21 [1] : vector<128x2xf32> to vector<128xf32>
      %29 = vector.shape_cast %28 : vector<128xf32> to vector<128x1xf32>
      %30 = vector.broadcast %29 : vector<128x1xf32> to vector<128x2xf32>
      %31 = arith.subf %27, %30 : vector<128x2xf32>
      %32 = math.exp %31 : vector<128x2xf32>
      %cst_22 = arith.constant dense<0.000000e+00> : vector<128xf32>
      %33 = vector.multi_reduction <add>, %32, %cst_22 [1] : vector<128x2xf32> to vector<128xf32>
      %34 = vector.shape_cast %33 : vector<128xf32> to vector<128x1xf32>
      %35 = math.log %34 : vector<128x1xf32>
      %36 = vector.broadcast %35 : vector<128x1xf32> to vector<128x2xf32>
      %37 = arith.subf %31, %36 : vector<128x2xf32>
      %c0_23 = arith.constant 0 : index
      %c0_24 = arith.constant 0 : index
      %38 = vector.load %arg8[%c0_23, %c0_24] : memref<128x2xf32, #tpu.memory_space<vmem>>, vector<128x2xf32>
      tpu.vector_store %arg8[%c0_23, %c0_24], %37 {strides = array<i32>} : memref<128x2xf32, #tpu.memory_space<vmem>>, vector<128x2xf32>,
    } else {
    }
    return
  }
  func.func @transform_0(%arg0: i32, %arg1: i32) -> (i32, i32) {
    %c0_i32 = arith.constant 0 : i32
    return %arg0, %arg1 : i32, i32
  }
  func.func @transform_1(%arg0: i32, %arg1: i32) -> (i32, i32) {
    %c0_i32 = arith.constant 0 : i32
    %c0_i32_0 = arith.constant 0 : i32
    return %arg1, %c0_i32 : i32, i32
  }
  func.func @transform_2(%arg0: i32, %arg1: i32) -> (i32, i32) {
    %c0_i32 = arith.constant 0 : i32
    %c0_i32_0 = arith.constant 0 : i32
    %c0_i32_1 = arith.constant 0 : i32
    return %c0_i32, %c0_i32_0 : i32, i32
  }
  func.func @transform_3(%arg0: i32, %arg1: i32) -> (i32, i32) {
    %c0_i32 = arith.constant 0 : i32
    %c0_i32_0 = arith.constant 0 : i32
    return %arg1, %c0_i32 : i32, i32
  }
  func.func @transform_4(%arg0: i32, %arg1: i32) -> (i32, i32) {
    %c0_i32 = arith.constant 0 : i32
    %c0_i32_0 = arith.constant 0 : i32
    return %arg0, %c0_i32 : i32, i32
  }
  func.func @transform_5(%arg0: i32, %arg1: i32) -> (i32, i32) {
    %c0_i32 = arith.constant 0 : i32
    %c0_i32_0 = arith.constant 0 : i32
    %c0_i32_1 = arith.constant 0 : i32
    return %c0_i32, %c0_i32_0 : i32, i32
  }
  func.func @transform_6(%arg0: i32, %arg1: i32) -> (i32, i32) {
    %c0_i32 = arith.constant 0 : i32
    %c0_i32_0 = arith.constant 0 : i32
    return %arg0, %c0_i32 : i32, i32
  }
}

</mosaic_0001>

<llo_original>
// kernel: tpu_custom_call.1
$region0: #{tpu_custom_call.1}
  #allocation0 [shape = 'u32[]', space=smem, size = 0x4, offset = 0x4, fixed_abs, tag = 'smem constant byte address 0x4 - core index']
  #allocation1 [shape = 'u32[144,128]{1,0:T(1,128)}', space=vmem, size = 0x12000, scoped, tag = 'internal scratch']
  #allocation2 [shape = 'f32[128,2]{1,0:T(8,128)}', space=vmem, size = 0x10000, scoped, tag = 'scratch operand']
  %s0 = inlined_call_operand.vmem [shape: bf16[256,256], index: 0, kind: input, shape index: {}]
  %s1 = inlined_call_operand.vmem [shape: f32[256,16], index: 1, kind: input, shape index: {}]
  %s2 = inlined_call_operand.vmem [shape: f32[16,2], index: 2, kind: input, shape index: {}]
  %s3 = inlined_call_operand.vmem [shape: f32[256,1], index: 3, kind: input, shape index: {}]
  %s4 = inlined_call_operand.vmem [shape: f32[256,1], index: 4, kind: input, shape index: {}]
  %s5 = inlined_call_operand.vmem [shape: f32[1,2], index: 5, kind: input, shape index: {}]
  %s6 = inlined_call_operand.vmem [shape: f32[256,2], index: 6, kind: output, shape index: {}]
  %s7 = sld [smem:[#allocation0]]
  $region110: #{tpu_custom_call.1} parent=0
    _
  %s9 = ssub.s32 1, %s7
  %s10 = scalar_select 0, %s9, %s7
  $region1: #{tpu_custom_call.1} parent=0
    #allocation3 [shape = 'u8[65536]{0}', space=vmem, size = 0x10000, scoped, tag = 'input window, operand 0']
    loop: start=0, step=1, limit=6
    $region2: #{tpu_custom_call.1} parent=1 // loop_pre_header
      _
    $region3: #{tpu_custom_call.1} parent=1 // loop_header
      %s12 = sphi 0, %s16
      %p13 = scmp.ge.s32.totalorder %s12, 6
      %s19 = sphi 0, %s31
      %s20 = sphi 0, %s27
      %s21 = sphi 0, %s19
      %s22 = sphi 0, %s20
      %s23 = sphi 0, %s21
      %s24 = sphi 0, %s22
      %s36 = sphi 0, %s38
      %s39 = sphi 0, %s36
      %s40 = sphi 0, %s39
      %s56 = sphi 0, %s40
      %s62 = sphi 0, %s64
      %s65 = sphi 0, %s62
      %s66 = sphi 0, %s65
      %s82 = sphi 0, %s66
      %s86 = sphi 0, %s86
      %s88 = sphi 0, %s86
      %s89 = sphi 0, %s88
      %s103 = sphi 0, %s89
      %s109 = sphi 0, %s111
      %s112 = sphi 0, %s109
      %s113 = sphi 0, %s112
      %s129 = sphi 0, %s113
      %s135 = sphi 0, %s137
      %s138 = sphi 0, %s135
      %s139 = sphi 0, %s138
      %s155 = sphi 0, %s139
      %s159 = sphi 0, %s159
      %s161 = sphi 0, %s159
      %s162 = sphi 0, %s161
      %s176 = sphi 0, %s162
      %s182 = sphi 0, %s184
      %s185 = sphi 0, %s182
      %s186 = sphi 0, %s185
      %s202 = sphi 0, %s186
    $region4: #{tpu_custom_call.1} parent=1 // loop_header_branch
      %15 = sbr.rel (%p13) target = $region8
    $region5: #{tpu_custom_call.1} parent=1 // loop_body
      %s17 = ssub.s32 %s12, 1
      %s18 = ssub.s32 %s12, 2
      %s25 = sadd.s32 1, %s20
      %p26 = scmp.ge.s32.totalorder %s25, 2
      %s27 = scalar_select %p26, 0, %s25
      %s28 = sadd.s32 1, %s19
      %s29 = scalar_select %p26, %s28, %s19
      %p30 = scmp.ge.s32.totalorder %s29, 2
      %s31 = scalar_select %p30, 0, %s29
      %s32 = ssub.s32 %s19, %s31
      %s33 = ssub.s32 %s20, %s27
      %s34 = sor.u32 %s32, %s33
      %p35 = scmp.eq.s32.totalorder %s34, 0
      %s37 = sadd.s32 %s36, 1
      %s38 = scalar_select %p35, %s36, %s37
      %p41 = pneg %p35
      %p42 = scmp.eq.s32.totalorder %s12, 3
      %p43 = por %p41, %p42
      %p44 = scmp.ne.s32.totalorder %s36, %s39
      %p45 = scmp.eq.s32.totalorder %s12, 0
      %p46 = por %p44, %p45
      %p47 = scmp.ne.s32.totalorder %s36, %s39
      %p48 = scmp.eq.s32.totalorder %s17, 3
      %p49 = por %p47, %p48
      %p50 = scmp.ne.s32.totalorder %s39, %s40
      %p51 = scmp.eq.s32.totalorder %s17, 0
      %p52 = por %p50, %p51
      %p53 = scmp.ne.s32.totalorder %s39, %s40
      %p54 = scmp.eq.s32.totalorder %s18, 3
      %p55 = por %p53, %p54
      %p57 = scmp.ne.s32.totalorder %s40, %s56
      %p58 = scmp.eq.s32.totalorder %s18, 0
      %p59 = por %p57, %p58
      %s60 = ssub.s32 %s20, %s27
      %p61 = scmp.eq.s32.totalorder %s60, 0
      %s63 = sadd.s32 %s62, 1
      %s64 = scalar_select %p61, %s62, %s63
      %p67 = pneg %p61
      %p68 = scmp.eq.s32.totalorder %s12, 3
      %p69 = por %p67, %p68
      %p70 = scmp.ne.s32.totalorder %s62, %s65
      %p71 = scmp.eq.s32.totalorder %s12, 0
      %p72 = por %p70, %p71
      %p73 = scmp.ne.s32.totalorder %s62, %s65
      %p74 = scmp.eq.s32.totalorder %s17, 3
      %p75 = por %p73, %p74
      %p76 = scmp.ne.s32.totalorder %s65, %s66
      %p77 = scmp.eq.s32.totalorder %s17, 0
      %p78 = por %p76, %p77
      %p79 = scmp.ne.s32.totalorder %s65, %s66
      %p80 = scmp.eq.s32.totalorder %s18, 3
      %p81 = por %p79, %p80
      %p83 = scmp.ne.s32.totalorder %s66, %s82
      %p84 = scmp.eq.s32.totalorder %s18, 0
      %p85 = por %p83, %p84
      %s87 = sadd.s32 %s86, 1
      %p90 = scmp.eq.s32.totalorder %s12, 3
      %p91 = scmp.ne.s32.totalorder %s86, %s88
      %p92 = scmp.eq.s32.totalorder %s12, 0
      %p93 = por %p91, %p92
      %p94 = scmp.ne.s32.totalorder %s86, %s88
      %p95 = scmp.eq.s32.totalorder %s17, 3
      %p96 = por %p94, %p95
      %p97 = scmp.ne.s32.totalorder %s88, %s89
      %p98 = scmp.eq.s32.totalorder %s17, 0
      %p99 = por %p97, %p98
      %p100 = scmp.ne.s32.totalorder %s88, %s89
      %p101 = scmp.eq.s32.totalorder %s18, 3
      %p102 = por %p100, %p101
      %p104 = scmp.ne.s32.totalorder %s89, %s103
      %p105 = scmp.eq.s32.totalorder %s18, 0
      %p106 = por %p104, %p105
      %s107 = ssub.s32 %s20, %s27
      %p108 = scmp.eq.s32.totalorder %s107, 0
      %s110 = sadd.s32 %s109, 1
      %s111 = scalar_select %p108, %s109, %s110
      %p114 = pneg %p108
      %p115 = scmp.eq.s32.totalorder %s12, 3
      %p116 = por %p114, %p115
      %p117 = scmp.ne.s32.totalorder %s109, %s112
      %p118 = scmp.eq.s32.totalorder %s12, 0
      %p119 = por %p117, %p118
      %p120 = scmp.ne.s32.totalorder %s109, %s112
      %p121 = scmp.eq.s32.totalorder %s17, 3
      %p122 = por %p120, %p121
      %p123 = scmp.ne.s32.totalorder %s112, %s113
      %p124 = scmp.eq.s32.totalorder %s17, 0
      %p125 = por %p123, %p124
      %p126 = scmp.ne.s32.totalorder %s112, %s113
      %p127 = scmp.eq.s32.totalorder %s18, 3
      %p128 = por %p126, %p127
      %p130 = scmp.ne.s32.totalorder %s113, %s129
      %p131 = scmp.eq.s32.totalorder %s18, 0
      %p132 = por %p130, %p131
      %s133 = ssub.s32 %s19, %s31
      %p134 = scmp.eq.s32.totalorder %s133, 0
      %s136 = sadd.s32 %s135, 1
      %s137 = scalar_select %p134, %s135, %s136
      %p140 = pneg %p134
      %p141 = scmp.eq.s32.totalorder %s12, 3
      %p142 = por %p140, %p141
      %p143 = scmp.ne.s32.totalorder %s135, %s138
      %p144 = scmp.eq.s32.totalorder %s12, 0
      %p145 = por %p143, %p144
      %p146 = scmp.ne.s32.totalorder %s135, %s138
      %p147 = scmp.eq.s32.totalorder %s17, 3
      %p148 = por %p146, %p147
      %p149 = scmp.ne.s32.totalorder %s138, %s139
      %p150 = scmp.eq.s32.totalorder %s17, 0
      %p151 = por %p149, %p150
      %p152 = scmp.ne.s32.totalorder %s138, %s139
      %p153 = scmp.eq.s32.totalorder %s18, 3
      %p154 = por %p152, %p153
      %p156 = scmp.ne.s32.totalorder %s139, %s155
      %p157 = scmp.eq.s32.totalorder %s18, 0
      %p158 = por %p156, %p157
      %s160 = sadd.s32 %s159, 1
      %p163 = scmp.eq.s32.totalorder %s12, 3
      %p164 = scmp.ne.s32.totalorder %s159, %s161
      %p165 = scmp.eq.s32.totalorder %s12, 0
      %p166 = por %p164, %p165
      %p167 = scmp.ne.s32.totalorder %s159, %s161
      %p168 = scmp.eq.s32.totalorder %s17, 3
      %p169 = por %p167, %p168
      %p170 = scmp.ne.s32.totalorder %s161, %s162
      %p171 = scmp.eq.s32.totalorder %s17, 0
      %p172 = por %p170, %p171
      %p173 = scmp.ne.s32.totalorder %s161, %s162
      %p174 = scmp.eq.s32.totalorder %s18, 3
      %p175 = por %p173, %p174
      %p177 = scmp.ne.s32.totalorder %s162, %s176
      %p178 = scmp.eq.s32.totalorder %s18, 0
      %p179 = por %p177, %p178
      %s180 = ssub.s32 %s19, %s31
      %p181 = scmp.eq.s32.totalorder %s180, 0
      %s183 = sadd.s32 %s182, 1
      %s184 = scalar_select %p181, %s182, %s183
      %p187 = pneg %p181
      %p188 = scmp.eq.s32.totalorder %s12, 3
      %p189 = por %p187, %p188
      %p190 = scmp.ne.s32.totalorder %s182, %s185
      %p191 = scmp.eq.s32.totalorder %s12, 0
      %p192 = por %p190, %p191
      %p193 = scmp.ne.s32.totalorder %s182, %s185
      %p194 = scmp.eq.s32.totalorder %s17, 3
      %p195 = por %p193, %p194
      %p196 = scmp.ne.s32.totalorder %s185, %s186
      %p197 = scmp.eq.s32.totalorder %s17, 0
      %p198 = por %p196, %p197
      %p199 = scmp.ne.s32.totalorder %s185, %s186
      %p200 = scmp.eq.s32.totalorder %s18, 3
      %p201 = por %p199, %p200
      %p203 = scmp.ne.s32.totalorder %s186, %s202
      %p204 = scmp.eq.s32.totalorder %s18, 0
      %p205 = por %p203, %p204
      %p206 = scmp.le.s32.totalorder 1, %s12
      %p207 = scmp.lt.s32.totalorder %s12, 5
      %p208 = pnand %p206, %p207
      %p209 = pneg %p208
      // Predicated region
      $region9: #{tpu_custom_call.1} parent=5 // pred_check
        _
      $region10: #{tpu_custom_call.1} parent=5 // pred_check_branch
        %211 = sbr.rel (%p208) target = $region12
      $region11: #{tpu_custom_call.1} parent=5 // pred_region
        %s212 = ssub.s32 %s12, 1
        // Predicated region
        $region13: #{tpu_custom_call.1} parent=11 // pred_check
          %p213 = pneg %p99
        $region14: #{tpu_custom_call.1} parent=11 // pred_check_branch
          %215 = sbr.rel (%p213) target = $region16
        $region15: #{tpu_custom_call.1} parent=11 // pred_region
          _
        $region16: #{tpu_custom_call.1} parent=11 // pred_fallthru
          _
        // Predicated region
        $region17: #{tpu_custom_call.1} parent=11 // pred_check
          %p216 = pneg %p172
        $region18: #{tpu_custom_call.1} parent=11 // pred_check_branch
          %218 = sbr.rel (%p216) target = $region20
        $region19: #{tpu_custom_call.1} parent=11 // pred_region
          _
        $region20: #{tpu_custom_call.1} parent=11 // pred_fallthru
          _
      $region12: #{tpu_custom_call.1} parent=5 // pred_fallthru
        _
      %p219 = scmp.lt.s32.totalorder %s12, 4
      // Predicated region
      $region21: #{tpu_custom_call.1} parent=5 // pred_check
        %p220 = pneg %p219
      $region22: #{tpu_custom_call.1} parent=5 // pred_check_branch
        %222 = sbr.rel (%p220) target = $region24
      $region23: #{tpu_custom_call.1} parent=5 // pred_region
        // Predicated region
        $region25: #{tpu_custom_call.1} parent=23 // pred_check
          %p223 = pneg %p46
        $region26: #{tpu_custom_call.1} parent=23 // pred_check_branch
          %225 = sbr.rel (%p223) target = $region28
        $region27: #{tpu_custom_call.1} parent=23 // pred_region
          %s226 = sand.u32 %s36, 1
          %s227 = sand.u32 %s36, 1
          %s228 = smul.addr %s227, 64
          %s229 = scalar_lea.vmem [#allocation3], %s228
          %s230 = smul.u32 16, %s19
          %s231 = smul.addr %s230, 2
          %s232 = sadd.s32 %s20, %s231
          %s233 = smul.addr %s232, 4
          %s234 = scalar_lea.vmem %s0, %s233
          // Predicated region
          $region29: #{tpu_custom_call.1} parent=27 // pred_check
            _
          $region30: #{tpu_custom_call.1} parent=27 // pred_check_branch
            %236 = sbr.rel (0) target = $region32
          $region31: #{tpu_custom_call.1} parent=27 // pred_region
            // Predicated region
            $region33: #{tpu_custom_call.1} parent=31 // pred_check
              _
            $region34: #{tpu_custom_call.1} parent=31 // pred_check_branch
              %238 = sbr.rel target = $region36
            $region35: #{tpu_custom_call.1} parent=31 // pred_region
              // Predicated region
              $region48: #{tpu_custom_call.1} parent=35 // pred_check
                _
              $region49: #{tpu_custom_call.1} parent=35 // pred_check_branch
                %283 = sbr.rel (0) target = $region51
              $region50: #{tpu_custom_call.1} parent=35 // pred_region
                loop: start=0, step=1, limit=1
                $region52: #{tpu_custom_call.1} parent=50 // loop_pre_header
                  _
                $region53: #{tpu_custom_call.1} parent=50 // loop_header
                  %s285 = sphi 0, %s289
                  %p286 = scmp.ge.s32.totalorder %s285, 1
                  %s290 = sphi %s234, %s234
                  %s291 = sphi %s229, %s229
                $region54: #{tpu_custom_call.1} parent=50 // loop_header_branch
                  %288 = sbr.rel (%p286) target = $region58
                $region55: #{tpu_custom_call.1} parent=50 // loop_body
                  _
                $region56: #{tpu_custom_call.1} parent=50 // loop_footer
                  %s289 = sadd.s32 1, %s285
                $region57: #{tpu_custom_call.1} parent=50 // loop_footer_branch
                  %284 = sbr.rel target = $region53
                $region58: #{tpu_custom_call.1} parent=50 // loop_exit
                  _
                loop: start=0, step=1, limit=1
                $region59: #{tpu_custom_call.1} parent=50 // loop_pre_header
                  _
                $region60: #{tpu_custom_call.1} parent=50 // loop_header
                  %s294 = sphi 0, %s298
                  %p295 = scmp.ge.s32.totalorder %s294, 1
                  %s299 = sphi %s234, %s234
                  %s300 = sphi %s229, %s229
                $region61: #{tpu_custom_call.1} parent=50 // loop_header_branch
                  %297 = sbr.rel (%p295) target = $region65
                $region62: #{tpu_custom_call.1} parent=50 // loop_body
                  %v301 = vld [vmem:[%s299] sm:$0xf]
                  %302 = vst [vmem:[%s300] sm:$0xf] %v301
                  %v303 = vld [vmem:[%s299 + $0x8] sm:$0xf]
                  %304 = vst [vmem:[%s300 + $0x4] sm:$0xf] %v303
                  %v305 = vld [vmem:[%s299 + $0x10] sm:$0xf]
                  %306 = vst [vmem:[%s300 + $0x8] sm:$0xf] %v305
                  %v307 = vld [vmem:[%s299 + $0x18] sm:$0xf]
                  %308 = vst [vmem:[%s300 + $0xc] sm:$0xf] %v307
                  %v309 = vld [vmem:[%s299 + $0x20] sm:$0xf]
                  %310 = vst [vmem:[%s300 + $0x10] sm:$0xf] %v309
                  %v311 = vld [vmem:[%s299 + $0x28] sm:$0xf]
                  %312 = vst [vmem:[%s300 + $0x14] sm:$0xf] %v311
                  %v313 = vld [vmem:[%s299 + $0x30] sm:$0xf]
                  %314 = vst [vmem:[%s300 + $0x18] sm:$0xf] %v313
                  %v315 = vld [vmem:[%s299 + $0x38] sm:$0xf]
                  %316 = vst [vmem:[%s300 + $0x1c] sm:$0xf] %v315
                  %v317 = vld [vmem:[%s299 + $0x40] sm:$0xf]
                  %318 = vst [vmem:[%s300 + $0x20] sm:$0xf] %v317
                  %v319 = vld [vmem:[%s299 + $0x48] sm:$0xf]
                  %320 = vst [vmem:[%s300 + $0x24] sm:$0xf] %v319
                  %v321 = vld [vmem:[%s299 + $0x50] sm:$0xf]
                  %322 = vst [vmem:[%s300 + $0x28] sm:$0xf] %v321
                  %v323 = vld [vmem:[%s299 + $0x58] sm:$0xf]
                  %324 = vst [vmem:[%s300 + $0x2c] sm:$0xf] %v323
                  %v325 = vld [vmem:[%s299 + $0x60] sm:$0xf]
                  %326 = vst [vmem:[%s300 + $0x30] sm:$0xf] %v325
                  %v327 = vld [vmem:[%s299 + $0x68] sm:$0xf]
                  %328 = vst [vmem:[%s300 + $0x34] sm:$0xf] %v327
                  %v329 = vld [vmem:[%s299 + $0x70] sm:$0xf]
                  %330 = vst [vmem:[%s300 + $0x38] sm:$0xf] %v329
                  %v331 = vld [vmem:[%s299 + $0x78] sm:$0xf]
                  %332 = vst [vmem:[%s300 + $0x3c] sm:$0xf] %v331
                $region63: #{tpu_custom_call.1} parent=50 // loop_footer
                  %s298 = sadd.s32 1, %s294
                $region64: #{tpu_custom_call.1} parent=50 // loop_footer_branch
                  %293 = sbr.rel target = $region60
                $region65: #{tpu_custom_call.1} parent=50 // loop_exit
                  _
              $region51: #{tpu_custom_call.1} parent=35 // pred_fallthru
                _
            $region36: #{tpu_custom_call.1} parent=31 // pred_fallthru
              _
            // Predicated region
            $region37: #{tpu_custom_call.1} parent=31 // pred_check
              _
            $region38: #{tpu_custom_call.1} parent=31 // pred_check_branch
              %240 = sbr.rel (0) target = $region40
            $region39: #{tpu_custom_call.1} parent=31 // pred_region
              loop: start=0, step=1, limit=1
              $region41: #{tpu_custom_call.1} parent=39 // loop_pre_header
                _
              $region42: #{tpu_custom_call.1} parent=39 // loop_header
                %s243 = sphi 0, %s247
                %p244 = scmp.ge.s32.totalorder %s243, 1
                %s248 = sphi %s234, %s234
                %s249 = sphi %s229, %s229
              $region43: #{tpu_custom_call.1} parent=39 // loop_header_branch
                %246 = sbr.rel (%p244) target = $region47
              $region44: #{tpu_custom_call.1} parent=39 // loop_body
                %v250 = vld [vmem:[%s248] sm:$0xf]
                %251 = vst [vmem:[%s249] sm:$0xf] %v250
                %v252 = vld [vmem:[%s248 + $0x8] sm:$0xf]
                %253 = vst [vmem:[%s249 + $0x4] sm:$0xf] %v252
                %v254 = vld [vmem:[%s248 + $0x10] sm:$0xf]
                %255 = vst [vmem:[%s249 + $0x8] sm:$0xf] %v254
                %v256 = vld [vmem:[%s248 + $0x18] sm:$0xf]
                %257 = vst [vmem:[%s249 + $0xc] sm:$0xf] %v256
                %v258 = vld [vmem:[%s248 + $0x20] sm:$0xf]
                %259 = vst [vmem:[%s249 + $0x10] sm:$0xf] %v258
                %v260 = vld [vmem:[%s248 + $0x28] sm:$0xf]
                %261 = vst [vmem:[%s249 + $0x14] sm:$0xf] %v260
                %v262 = vld [vmem:[%s248 + $0x30] sm:$0xf]
                %263 = vst [vmem:[%s249 + $0x18] sm:$0xf] %v262
                %v264 = vld [vmem:[%s248 + $0x38] sm:$0xf]
                %265 = vst [vmem:[%s249 + $0x1c] sm:$0xf] %v264
                %v266 = vld [vmem:[%s248 + $0x40] sm:$0xf]
                %267 = vst [vmem:[%s249 + $0x20] sm:$0xf] %v266
                %v268 = vld [vmem:[%s248 + $0x48] sm:$0xf]
                %269 = vst [vmem:[%s249 + $0x24] sm:$0xf] %v268
                %v270 = vld [vmem:[%s248 + $0x50] sm:$0xf]
                %271 = vst [vmem:[%s249 + $0x28] sm:$0xf] %v270
                %v272 = vld [vmem:[%s248 + $0x58] sm:$0xf]
                %273 = vst [vmem:[%s249 + $0x2c] sm:$0xf] %v272
                %v274 = vld [vmem:[%s248 + $0x60] sm:$0xf]
                %275 = vst [vmem:[%s249 + $0x30] sm:$0xf] %v274
                %v276 = vld [vmem:[%s248 + $0x68] sm:$0xf]
                %277 = vst [vmem:[%s249 + $0x34] sm:$0xf] %v276
                %v278 = vld [vmem:[%s248 + $0x70] sm:$0xf]
                %279 = vst [vmem:[%s249 + $0x38] sm:$0xf] %v278
                %v280 = vld [vmem:[%s248 + $0x78] sm:$0xf]
                %281 = vst [vmem:[%s249 + $0x3c] sm:$0xf] %v280
              $region45: #{tpu_custom_call.1} parent=39 // loop_footer
                %s247 = sadd.s32 1, %s243
              $region46: #{tpu_custom_call.1} parent=39 // loop_footer_branch
                %242 = sbr.rel target = $region42
              $region47: #{tpu_custom_call.1} parent=39 // loop_exit
                _
            $region40: #{tpu_custom_call.1} parent=31 // pred_fallthru
              _
          $region32: #{tpu_custom_call.1} parent=27 // pred_fallthru
            _
          %333 = vnop
        $region28: #{tpu_custom_call.1} parent=23 // pred_fallthru
          _
        // Predicated region
        $region66: #{tpu_custom_call.1} parent=23 // pred_check
          %p334 = pneg %p72
        $region67: #{tpu_custom_call.1} parent=23 // pred_check_branch
          %336 = sbr.rel (%p334) target = $region69
        $region68: #{tpu_custom_call.1} parent=23 // pred_region
          %s337 = smul.u32 16, %s20
          %p338 = scmp.lt.s32.totalorder %s337, 31
          %s339 = scalar_select %p338, %s337, 31
          %s340 = smul.addr %s339, 8
          %s341 = scalar_lea.vmem %s1, %s340
          %s342 = smul.u32 16, %s20
        $region69: #{tpu_custom_call.1} parent=23 // pred_fallthru
          _
        // Predicated region
        $region70: #{tpu_custom_call.1} parent=23 // pred_check
          %p343 = pneg %p119
        $region71: #{tpu_custom_call.1} parent=23 // pred_check_branch
          %345 = sbr.rel (%p343) target = $region73
        $region72: #{tpu_custom_call.1} parent=23 // pred_region
          %s346 = smul.u32 16, %s20
          %p347 = scmp.lt.s32.totalorder %s346, 31
          %s348 = scalar_select %p347, %s346, 31
          %s349 = smul.addr %s348, 8
          %s350 = scalar_lea.vmem %s3, %s349
          %s351 = smul.u32 16, %s20
        $region73: #{tpu_custom_call.1} parent=23 // pred_fallthru
          _
        // Predicated region
        $region74: #{tpu_custom_call.1} parent=23 // pred_check
          %p352 = pneg %p145
        $region75: #{tpu_custom_call.1} parent=23 // pred_check_branch
          %354 = sbr.rel (%p352) target = $region77
        $region76: #{tpu_custom_call.1} parent=23 // pred_region
          %s355 = smul.u32 16, %s19
          %p356 = scmp.lt.s32.totalorder %s355, 31
          %s357 = scalar_select %p356, %s355, 31
          %s358 = smul.addr %s357, 8
          %s359 = scalar_lea.vmem %s4, %s358
          %s360 = smul.u32 16, %s19
        $region77: #{tpu_custom_call.1} parent=23 // pred_fallthru
          _
      $region24: #{tpu_custom_call.1} parent=5 // pred_fallthru
        _
      %p361 = scmp.le.s32.totalorder 1, %s12
      %p362 = scmp.lt.s32.totalorder %s12, 5
      %p363 = pnand %p361, %p362
      %p364 = pneg %p363
      // Predicated region
      $region78: #{tpu_custom_call.1} parent=5 // pred_check
        _
      $region79: #{tpu_custom_call.1} parent=5 // pred_check_branch
        %366 = sbr.rel (%p363) target = $region81
      $region80: #{tpu_custom_call.1} parent=5 // pred_region
        %s367 = ssub.s32 %s12, 1
        %s368 = sand.u32 %s39, 1
        %s369 = sand.u32 %s39, 1
        %s370 = smul.addr %s369, 64
        %s371 = scalar_lea.vmem [#allocation3], %s370
        // Predicated region
        $region82: #{tpu_custom_call.1} parent=80 // pred_check
          %p372 = pneg %p52
        $region83: #{tpu_custom_call.1} parent=80 // pred_check_branch
          %374 = sbr.rel (%p372) target = $region85
        $region84: #{tpu_custom_call.1} parent=80 // pred_region
          _
        $region85: #{tpu_custom_call.1} parent=80 // pred_fallthru
          _
        %s375 = sand.u32 %s39, 1
        %s376 = sand.u32 %s39, 1
        %s377 = smul.addr %s376, 64
        %s378 = scalar_lea.vmem [#allocation3], %s377
        %p379 = pneg %p52
        %p380 = pneg %p49
        %s381 = smul.u32 16, %s22
        %p382 = scmp.lt.s32.totalorder %s381, 31
        %s383 = scalar_select %p382, %s381, 31
        %s384 = smul.addr %s383, 8
        %s385 = scalar_lea.vmem %s1, %s384
        %p386 = pneg %p78
        %p387 = pneg %p75
        %p388 = pneg %p99
        %p389 = pneg %p96
        %s390 = smul.u32 16, %s22
        %p391 = scmp.lt.s32.totalorder %s390, 31
        %s392 = scalar_select %p391, %s390, 31
        %s393 = smul.addr %s392, 8
        %s394 = scalar_lea.vmem %s3, %s393
        %p395 = pneg %p125
        %p396 = pneg %p122
        %s397 = smul.u32 16, %s21
        %p398 = scmp.lt.s32.totalorder %s397, 31
        %s399 = scalar_select %p398, %s397, 31
        %s400 = smul.addr %s399, 8
        %s401 = scalar_lea.vmem %s4, %s400
        %p402 = pneg %p151
        %p403 = pneg %p148
        %p404 = pneg %p172
        %p405 = pneg %p169
        %p406 = pneg %p198
        %p407 = pneg %p195
        %s408 = smul.u32 16, %s21
        %p409 = scmp.lt.s32.totalorder %s408, 31
        %s410 = scalar_select %p409, %s408, 31
        %s411 = smul.addr %s410, 8
        %s412 = scalar_lea.vmem %s6, %s411
        %s413 = smul.u32 16, %s21
        %s414 = smul.u32 16, %s22
        %p415 = scmp.lt.s32.totalorder %s414, 31
        %s416 = scalar_select %p415, %s414, 31
        %s417 = smul.addr %s416, 8
        %s418 = scalar_lea.vmem %s1, %s417
        %s419 = smul.u32 16, %s22
        %s420 = smul.u32 16, %s22
        %p421 = scmp.lt.s32.totalorder %s420, 31
        %s422 = scalar_select %p421, %s420, 31
        %s423 = smul.addr %s422, 8
        %s424 = scalar_lea.vmem %s3, %s423
        %s425 = smul.u32 16, %s22
        %s426 = smul.u32 16, %s21
        %p427 = scmp.lt.s32.totalorder %s426, 31
        %s428 = scalar_select %p427, %s426, 31
        %s429 = smul.addr %s428, 8
        %s430 = scalar_lea.vmem %s4, %s429
        %s431 = smul.u32 16, %s21
        %s432 = smul.u32 16, %s21
        %p433 = scmp.lt.s32.totalorder %s432, 31
        %s434 = scalar_select %p433, %s432, 31
        %s435 = smul.addr %s434, 8
        %s436 = scalar_lea.vmem %s6, %s435
        %s437 = smul.u32 16, %s21
        %p438 = scmp.eq.s32.totalorder %s22, 0
        // Predicated region
        $region86: #{tpu_custom_call.1} parent=80 // pred_check
          %p439 = pneg %p438
        $region87: #{tpu_custom_call.1} parent=80 // pred_check_branch
          %441 = sbr.rel (%p439) target = $region89
        $region88: #{tpu_custom_call.1} parent=80 // pred_region
          %vm442 = vcmask 15360
          %443 = vst.msk [vmem:[#allocation2] sm:$0xff] %vm442, 0.0
          %444 = vst.msk [vmem:[#allocation2 + $0x8] sm:$0xff] %vm442, 0.0
          %445 = vst.msk [vmem:[#allocation2 + $0x10] sm:$0xff] %vm442, 0.0
          %446 = vst.msk [vmem:[#allocation2 + $0x18] sm:$0xff] %vm442, 0.0
          %447 = vst.msk [vmem:[#allocation2 + $0x20] sm:$0xff] %vm442, 0.0
          %448 = vst.msk [vmem:[#allocation2 + $0x28] sm:$0xff] %vm442, 0.0
          %449 = vst.msk [vmem:[#allocation2 + $0x30] sm:$0xff] %vm442, 0.0
          %450 = vst.msk [vmem:[#allocation2 + $0x38] sm:$0xff] %vm442, 0.0
          %451 = vst.msk [vmem:[#allocation2 + $0x40] sm:$0xff] %vm442, 0.0
          %452 = vst.msk [vmem:[#allocation2 + $0x48] sm:$0xff] %vm442, 0.0
          %453 = vst.msk [vmem:[#allocation2 + $0x50] sm:$0xff] %vm442, 0.0
          %454 = vst.msk [vmem:[#allocation2 + $0x58] sm:$0xff] %vm442, 0.0
          %455 = vst.msk [vmem:[#allocation2 + $0x60] sm:$0xff] %vm442, 0.0
          %456 = vst.msk [vmem:[#allocation2 + $0x68] sm:$0xff] %vm442, 0.0
          %457 = vst.msk [vmem:[#allocation2 + $0x70] sm:$0xff] %vm442, 0.0
          %458 = vst.msk [vmem:[#allocation2 + $0x78] sm:$0xff] %vm442, 0.0
        $region89: #{tpu_custom_call.1} parent=80 // pred_fallthru
          _
        %v459 = vld [vmem:[%s418] sm:$0xff]
        %v460 = vld [vmem:[%s418 + $0x8] sm:$0xff]
        %v461 = vld [vmem:[%s418 + $0x10] sm:$0xff]
        %v462 = vld [vmem:[%s418 + $0x18] sm:$0xff]
        %v463 = vld [vmem:[%s418 + $0x20] sm:$0xff]
        %v464 = vld [vmem:[%s418 + $0x28] sm:$0xff]
        %v465 = vld [vmem:[%s418 + $0x30] sm:$0xff]
        %v466 = vld [vmem:[%s418 + $0x38] sm:$0xff]
        %v467 = vld [vmem:[%s418 + $0x40] sm:$0xff]
        %v468 = vld [vmem:[%s418 + $0x48] sm:$0xff]
        %v469 = vld [vmem:[%s418 + $0x50] sm:$0xff]
        %v470 = vld [vmem:[%s418 + $0x58] sm:$0xff]
        %v471 = vld [vmem:[%s418 + $0x60] sm:$0xff]
        %v472 = vld [vmem:[%s418 + $0x68] sm:$0xff]
        %v473 = vld [vmem:[%s418 + $0x70] sm:$0xff]
        %v474 = vld [vmem:[%s418 + $0x78] sm:$0xff]
        %v475 = vld [vmem:[%s2] sm:$0xff]
        %v476 = vld [vmem:[%s2 + $0x8] sm:$0xff]
        %vm477 = vcmask 130048
        %v479 = vsel %vm477, %v459, 0
        %v482 = vsel %vm477, %v460, 0
        %v485 = vsel %vm477, %v461, 0
        %v488 = vsel %vm477, %v462, 0
        %v491 = vsel %vm477, %v463, 0
        %v494 = vsel %vm477, %v464, 0
        %v497 = vsel %vm477, %v465, 0
        %v500 = vsel %vm477, %v466, 0
        %v503 = vsel %vm477, %v467, 0
        %v506 = vsel %vm477, %v468, 0
        %v509 = vsel %vm477, %v469, 0
        %v512 = vsel %vm477, %v470, 0
        %v515 = vsel %vm477, %v471, 0
        %v518 = vsel %vm477, %v472, 0
        %v521 = vsel %vm477, %v473, 0
        %v524 = vsel %vm477, %v474, 0
        %526 = vmatprep.subr.mxu0 0.0
        %527 = vmatpush1.msra.mxu0 %v475
        %528 = vmatprep.subr.mxu0 0.0
        %529 = vmatpush1.msra.mxu0 %v476
        %530 = vmatprep.subr.mxu0 0.0
        %531 = vmatpush1.msra.mxu0 0.0
        %532 = vmatprep.subr.mxu0 0.0
        %533 = vmatpush1.msra.mxu0 0.0
        %534 = vmatprep.subr.mxu0 0.0
        %535 = vmatpush1.msra.mxu0 0.0
        %536 = vmatprep.subr.mxu0 0.0
        %537 = vmatpush1.msra.mxu0 0.0
        %538 = vmatprep.subr.mxu0 0.0
        %539 = vmatpush1.msra.mxu0 0.0
        %540 = vmatprep.subr.mxu0 0.0
        %541 = vmatpush1.msra.mxu0 0.0
        %542 = vmatprep.subr.mxu0 0.0
        %543 = vmatpush1.msra.mxu0 0.0
        %544 = vmatprep.subr.mxu0 0.0
        %545 = vmatpush1.msra.mxu0 0.0
        %546 = vmatprep.subr.mxu0 0.0
        %547 = vmatpush1.msra.mxu0 0.0
        %548 = vmatprep.subr.mxu0 0.0
        %549 = vmatpush1.msra.mxu0 0.0
        %550 = vmatprep.subr.mxu0 0.0
        %551 = vmatpush1.msra.mxu0 0.0
        %552 = vmatprep.subr.mxu0 0.0
        %553 = vmatpush1.msra.mxu0 0.0
        %554 = vmatprep.subr.mxu0 0.0
        %555 = vmatpush1.msra.mxu0 0.0
        %556 = vmatprep.subr.mxu0 0.0
        %557 = vmatpush1.msra.mxu0 0.0
        %558 = vmatprep.subr.mxu0 0.0
        %559 = vmatpush1.msra.mxu0 0.0
        %560 = vmatprep.subr.mxu0 0.0
        %561 = vmatpush1.msra.mxu0 0.0
        %562 = vmatprep.subr.mxu0 0.0
        %563 = vmatpush1.msra.mxu0 0.0
        %564 = vmatprep.subr.mxu0 0.0
        %565 = vmatpush1.msra.mxu0 0.0
        %566 = vmatprep.subr.mxu0 0.0
        %567 = vmatpush1.msra.mxu0 0.0
        %568 = vmatprep.subr.mxu0 0.0
        %569 = vmatpush1.msra.mxu0 0.0
        %570 = vmatprep.subr.mxu0 0.0
        %571 = vmatpush1.msra.mxu0 0.0
        %572 = vmatprep.subr.mxu0 0.0
        %573 = vmatpush1.msra.mxu0 0.0
        %574 = vmatprep.subr.mxu0 0.0
        %575 = vmatpush1.msra.mxu0 0.0
        %576 = vmatprep.subr.mxu0 0.0
        %577 = vmatpush1.msra.mxu0 0.0
        %578 = vmatprep.subr.mxu0 0.0
        %579 = vmatpush1.msra.mxu0 0.0
        %580 = vmatprep.subr.mxu0 0.0
        %581 = vmatpush1.msra.mxu0 0.0
        %582 = vmatprep.subr.mxu0 0.0
        %583 = vmatpush1.msra.mxu0 0.0
        %584 = vmatprep.subr.mxu0 0.0
        %585 = vmatpush1.msra.mxu0 0.0
        %586 = vmatprep.subr.mxu0 0.0
        %587 = vmatpush1.msra.mxu0 0.0
        %588 = vmatprep.subr.mxu0 0.0
        %589 = vmatpush1.msra.mxu0 0.0
        %590 = vmatprep.mubr.f32.mxu0 0.0
        %591 = vmatmul.mubr.f32.gmra.mrb[0].mxu0 %v479
        %v592 = vpop.f32.mrb[0].mxu0
        %v593 = vadd.f32 0.0, %v592
        %v594 = vpop.f32.mrb[0].mxu0
        %595 = vmatprep.mubr.f32.mxu0 0.0
        %596 = vmatmul.mubr.f32.gmra.mrb[0].mxu0 %v482
        %v597 = vpop.f32.mrb[0].mxu0
        %v598 = vadd.f32 0.0, %v597
        %v599 = vpop.f32.mrb[0].mxu0
        %600 = vmatprep.mubr.f32.mxu0 0.0
        %601 = vmatmul.mubr.f32.gmra.mrb[0].mxu0 %v485
        %v602 = vpop.f32.mrb[0].mxu0
        %v603 = vadd.f32 0.0, %v602
        %v604 = vpop.f32.mrb[0].mxu0
        %605 = vmatprep.mubr.f32.mxu0 0.0
        %606 = vmatmul.mubr.f32.gmra.mrb[0].mxu0 %v488
        %v607 = vpop.f32.mrb[0].mxu0
        %v608 = vadd.f32 0.0, %v607
        %v609 = vpop.f32.mrb[0].mxu0
        %610 = vmatprep.mubr.f32.mxu0 0.0
        %611 = vmatmul.mubr.f32.gmra.mrb[0].mxu0 %v491
        %v612 = vpop.f32.mrb[0].mxu0
        %v613 = vadd.f32 0.0, %v612
        %v614 = vpop.f32.mrb[0].mxu0
        %615 = vmatprep.mubr.f32.mxu0 0.0
        %616 = vmatmul.mubr.f32.gmra.mrb[0].mxu0 %v494
        %v617 = vpop.f32.mrb[0].mxu0
        %v618 = vadd.f32 0.0, %v617
        %v619 = vpop.f32.mrb[0].mxu0
        %620 = vmatprep.mubr.f32.mxu0 0.0
        %621 = vmatmul.mubr.f32.gmra.mrb[0].mxu0 %v497
        %v622 = vpop.f32.mrb[0].mxu0
        %v623 = vadd.f32 0.0, %v622
        %v624 = vpop.f32.mrb[0].mxu0
        %625 = vmatprep.mubr.f32.mxu0 0.0
        %626 = vmatmul.mubr.f32.gmra.mrb[0].mxu0 %v500
        %v627 = vpop.f32.mrb[0].mxu0
        %v628 = vadd.f32 0.0, %v627
        %v629 = vpop.f32.mrb[0].mxu0
        %630 = vmatprep.mubr.f32.mxu0 0.0
        %631 = vmatmul.mubr.f32.gmra.mrb[0].mxu0 %v503
        %v632 = vpop.f32.mrb[0].mxu0
        %v633 = vadd.f32 0.0, %v632
        %v634 = vpop.f32.mrb[0].mxu0
        %635 = vmatprep.mubr.f32.mxu0 0.0
        %636 = vmatmul.mubr.f32.gmra.mrb[0].mxu0 %v506
        %v637 = vpop.f32.mrb[0].mxu0
        %v638 = vadd.f32 0.0, %v637
        %v639 = vpop.f32.mrb[0].mxu0
        %640 = vmatprep.mubr.f32.mxu0 0.0
        %641 = vmatmul.mubr.f32.gmra.mrb[0].mxu0 %v509
        %v642 = vpop.f32.mrb[0].mxu0
        %v643 = vadd.f32 0.0, %v642
        %v644 = vpop.f32.mrb[0].mxu0
        %645 = vmatprep.mubr.f32.mxu0 0.0
        %646 = vmatmul.mubr.f32.gmra.mrb[0].mxu0 %v512
        %v647 = vpop.f32.mrb[0].mxu0
        %v648 = vadd.f32 0.0, %v647
        %v649 = vpop.f32.mrb[0].mxu0
        %650 = vmatprep.mubr.f32.mxu0 0.0
        %651 = vmatmul.mubr.f32.gmra.mrb[0].mxu0 %v515
        %v652 = vpop.f32.mrb[0].mxu0
        %v653 = vadd.f32 0.0, %v652
        %v654 = vpop.f32.mrb[0].mxu0
        %655 = vmatprep.mubr.f32.mxu0 0.0
        %656 = vmatmul.mubr.f32.gmra.mrb[0].mxu0 %v518
        %v657 = vpop.f32.mrb[0].mxu0
        %v658 = vadd.f32 0.0, %v657
        %v659 = vpop.f32.mrb[0].mxu0
        %660 = vmatprep.mubr.f32.mxu0 0.0
        %661 = vmatmul.mubr.f32.gmra.mrb[0].mxu0 %v521
        %v662 = vpop.f32.mrb[0].mxu0
        %v663 = vadd.f32 0.0, %v662
        %v664 = vpop.f32.mrb[0].mxu0
        %665 = vmatprep.mubr.f32.mxu0 0.0
        %666 = vmatmul.mubr.f32.gmra.mrb[0].mxu0 %v524
        %v667 = vpop.f32.mrb[0].mxu0
        %v668 = vadd.f32 0.0, %v667
        %v669 = vpop.f32.mrb[0].mxu0
        %670 = vdwg.mxu0
        %v671 = vld [vmem:[%s424] sm:$0xff]
        %v672 = vld [vmem:[%s424 + $0x8] sm:$0xff]
        %v673 = vld [vmem:[%s424 + $0x10] sm:$0xff]
        %v674 = vld [vmem:[%s424 + $0x18] sm:$0xff]
        %v675 = vld [vmem:[%s424 + $0x20] sm:$0xff]
        %v676 = vld [vmem:[%s424 + $0x28] sm:$0xff]
        %v677 = vld [vmem:[%s424 + $0x30] sm:$0xff]
        %v678 = vld [vmem:[%s424 + $0x38] sm:$0xff]
        %v679 = vld [vmem:[%s424 + $0x40] sm:$0xff]
        %v680 = vld [vmem:[%s424 + $0x48] sm:$0xff]
        %v681 = vld [vmem:[%s424 + $0x50] sm:$0xff]
        %v682 = vld [vmem:[%s424 + $0x58] sm:$0xff]
        %v683 = vld [vmem:[%s424 + $0x60] sm:$0xff]
        %v684 = vld [vmem:[%s424 + $0x68] sm:$0xff]
        %v685 = vld [vmem:[%s424 + $0x70] sm:$0xff]
        %v686 = vld [vmem:[%s424 + $0x78] sm:$0xff]
        %688 = vset.pattern.permute.xlu0 0
        %689 = vperm.xlu0 %688, %v671
        %v690 = vpop.permute.xlu0 %689
        %693 = vset.pattern.permute.xlu0 0
        %694 = vperm.xlu0 %693, %v672
        %v695 = vpop.permute.xlu0 %694
        %698 = vset.pattern.permute.xlu0 0
        %699 = vperm.xlu0 %698, %v673
        %v700 = vpop.permute.xlu0 %699
        %703 = vset.pattern.permute.xlu0 0
        %704 = vperm.xlu0 %703, %v674
        %v705 = vpop.permute.xlu0 %704
        %708 = vset.pattern.permute.xlu0 0
        %709 = vperm.xlu0 %708, %v675
        %v710 = vpop.permute.xlu0 %709
        %713 = vset.pattern.permute.xlu0 0
        %714 = vperm.xlu0 %713, %v676
        %v715 = vpop.permute.xlu0 %714
        %718 = vset.pattern.permute.xlu0 0
        %719 = vperm.xlu0 %718, %v677
        %v720 = vpop.permute.xlu0 %719
        %723 = vset.pattern.permute.xlu0 0
        %724 = vperm.xlu0 %723, %v678
        %v725 = vpop.permute.xlu0 %724
        %728 = vset.pattern.permute.xlu0 0
        %729 = vperm.xlu0 %728, %v679
        %v730 = vpop.permute.xlu0 %729
        %733 = vset.pattern.permute.xlu0 0
        %734 = vperm.xlu0 %733, %v680
        %v735 = vpop.permute.xlu0 %734
        %738 = vset.pattern.permute.xlu0 0
        %739 = vperm.xlu0 %738, %v681
        %v740 = vpop.permute.xlu0 %739
        %743 = vset.pattern.permute.xlu0 0
        %744 = vperm.xlu0 %743, %v682
        %v745 = vpop.permute.xlu0 %744
        %748 = vset.pattern.permute.xlu0 0
        %749 = vperm.xlu0 %748, %v683
        %v750 = vpop.permute.xlu0 %749
        %753 = vset.pattern.permute.xlu0 0
        %754 = vperm.xlu0 %753, %v684
        %v755 = vpop.permute.xlu0 %754
        %758 = vset.pattern.permute.xlu0 0
        %759 = vperm.xlu0 %758, %v685
        %v760 = vpop.permute.xlu0 %759
        %763 = vset.pattern.permute.xlu0 0
        %764 = vperm.xlu0 %763, %v686
        %v765 = vpop.permute.xlu0 %764
        %v767 = vmul.f32 %v690, %v593
        %v768 = vmul.f32 %v695, %v598
        %v769 = vmul.f32 %v700, %v603
        %v770 = vmul.f32 %v705, %v608
        %v771 = vmul.f32 %v710, %v613
        %v772 = vmul.f32 %v715, %v618
        %v773 = vmul.f32 %v720, %v623
        %v774 = vmul.f32 %v725, %v628
        %v775 = vmul.f32 %v730, %v633
        %v776 = vmul.f32 %v735, %v638
        %v777 = vmul.f32 %v740, %v643
        %v778 = vmul.f32 %v745, %v648
        %v779 = vmul.f32 %v750, %v653
        %v780 = vmul.f32 %v755, %v658
        %v781 = vmul.f32 %v760, %v663
        %v782 = vmul.f32 %v765, %v668
        %v783 = vld [vmem:[#allocation2] sm:$0xff]
        %v784 = vld [vmem:[#allocation2 + $0x8] sm:$0xff]
        %v785 = vld [vmem:[#allocation2 + $0x10] sm:$0xff]
        %v786 = vld [vmem:[#allocation2 + $0x18] sm:$0xff]
        %v787 = vld [vmem:[#allocation2 + $0x20] sm:$0xff]
        %v788 = vld [vmem:[#allocation2 + $0x28] sm:$0xff]
        %v789 = vld [vmem:[#allocation2 + $0x30] sm:$0xff]
        %v790 = vld [vmem:[#allocation2 + $0x38] sm:$0xff]
        %v791 = vld [vmem:[#allocation2 + $0x40] sm:$0xff]
        %v792 = vld [vmem:[#allocation2 + $0x48] sm:$0xff]
        %v793 = vld [vmem:[#allocation2 + $0x50] sm:$0xff]
        %v794 = vld [vmem:[#allocation2 + $0x58] sm:$0xff]
        %v795 = vld [vmem:[#allocation2 + $0x60] sm:$0xff]
        %v796 = vld [vmem:[#allocation2 + $0x68] sm:$0xff]
        %v797 = vld [vmem:[#allocation2 + $0x70] sm:$0xff]
        %v798 = vld [vmem:[#allocation2 + $0x78] sm:$0xff]
        %v799 = vld [vmem:[%s371] sm:$0xf]
        %v800 = vld [vmem:[%s371 + $0x4] sm:$0xf]
        %v801 = vld [vmem:[%s371 + $0x8] sm:$0xf]
        %v802 = vld [vmem:[%s371 + $0xc] sm:$0xf]
        %v803 = vld [vmem:[%s371 + $0x10] sm:$0xf]
        %v804 = vld [vmem:[%s371 + $0x14] sm:$0xf]
        %v805 = vld [vmem:[%s371 + $0x18] sm:$0xf]
        %v806 = vld [vmem:[%s371 + $0x1c] sm:$0xf]
        %v807 = vld [vmem:[%s371 + $0x20] sm:$0xf]
        %v808 = vld [vmem:[%s371 + $0x24] sm:$0xf]
        %v809 = vld [vmem:[%s371 + $0x28] sm:$0xf]
        %v810 = vld [vmem:[%s371 + $0x2c] sm:$0xf]
        %v811 = vld [vmem:[%s371 + $0x30] sm:$0xf]
        %v812 = vld [vmem:[%s371 + $0x34] sm:$0xf]
        %v813 = vld [vmem:[%s371 + $0x38] sm:$0xf]
        %v814 = vld [vmem:[%s371 + $0x3c] sm:$0xf]
        %v815 = vunpack.c.l.bf16 %v799
        %v816 = vunpack.c.l.bf16 %v800
        %v817 = vunpack.c.l.bf16 %v801
        %v818 = vunpack.c.l.bf16 %v802
        %v819 = vunpack.c.l.bf16 %v803
        %v820 = vunpack.c.l.bf16 %v804
        %v821 = vunpack.c.l.bf16 %v805
        %v822 = vunpack.c.l.bf16 %v806
        %v823 = vunpack.c.l.bf16 %v807
        %v824 = vunpack.c.l.bf16 %v808
        %v825 = vunpack.c.l.bf16 %v809
        %v826 = vunpack.c.l.bf16 %v810
        %v827 = vunpack.c.l.bf16 %v811
        %v828 = vunpack.c.l.bf16 %v812
        %v829 = vunpack.c.l.bf16 %v813
        %v830 = vunpack.c.l.bf16 %v814
        %831 = vmatprep.subr.mxu0 0.0
        %832 = vmatpush1.msra.mxu0 %v767
        %833 = vmatprep.subr.mxu0 0.0
        %834 = vmatpush1.msra.mxu0 %v768
        %835 = vmatprep.subr.mxu0 0.0
        %836 = vmatpush1.msra.mxu0 %v769
        %837 = vmatprep.subr.mxu0 0.0
        %838 = vmatpush1.msra.mxu0 %v770
        %839 = vmatprep.subr.mxu0 0.0
        %840 = vmatpush1.msra.mxu0 %v771
        %841 = vmatprep.subr.mxu0 0.0
        %842 = vmatpush1.msra.mxu0 %v772
        %843 = vmatprep.subr.mxu0 0.0
        %844 = vmatpush1.msra.mxu0 %v773
        %845 = vmatprep.subr.mxu0 0.0
        %846 = vmatpush1.msra.mxu0 %v774
        %847 = vmatprep.subr.mxu0 0.0
        %848 = vmatpush1.msra.mxu0 %v775
        %849 = vmatprep.subr.mxu0 0.0
        %850 = vmatpush1.msra.mxu0 %v776
        %851 = vmatprep.subr.mxu0 0.0
        %852 = vmatpush1.msra.mxu0 %v777
        %853 = vmatprep.subr.mxu0 0.0
        %854 = vmatpush1.msra.mxu0 %v778
        %855 = vmatprep.subr.mxu0 0.0
        %856 = vmatpush1.msra.mxu0 %v779
        %857 = vmatprep.subr.mxu0 0.0
        %858 = vmatpush1.msra.mxu0 %v780
        %859 = vmatprep.subr.mxu0 0.0
        %860 = vmatpush1.msra.mxu0 %v781
        %861 = vmatprep.subr.mxu0 0.0
        %862 = vmatpush1.msra.mxu0 %v782
        %863 = vmatprep.subr.mxu0 0.0
        %864 = vmatpush1.msra.mxu0 0.0
        %865 = vmatprep.subr.mxu0 0.0
        %866 = vmatpush1.msra.mxu0 0.0
        %867 = vmatprep.subr.mxu0 0.0
        %868 = vmatpush1.msra.mxu0 0.0
        %869 = vmatprep.subr.mxu0 0.0
        %870 = vmatpush1.msra.mxu0 0.0
        %871 = vmatprep.subr.mxu0 0.0
        %872 = vmatpush1.msra.mxu0 0.0
        %873 = vmatprep.subr.mxu0 0.0
        %874 = vmatpush1.msra.mxu0 0.0
        %875 = vmatprep.subr.mxu0 0.0
        %876 = vmatpush1.msra.mxu0 0.0
        %877 = vmatprep.subr.mxu0 0.0
        %878 = vmatpush1.msra.mxu0 0.0
        %879 = vmatprep.subr.mxu0 0.0
        %880 = vmatpush1.msra.mxu0 0.0
        %881 = vmatprep.subr.mxu0 0.0
        %882 = vmatpush1.msra.mxu0 0.0
        %883 = vmatprep.subr.mxu0 0.0
        %884 = vmatpush1.msra.mxu0 0.0
        %885 = vmatprep.subr.mxu0 0.0
        %886 = vmatpush1.msra.mxu0 0.0
        %887 = vmatprep.subr.mxu0 0.0
        %888 = vmatpush1.msra.mxu0 0.0
        %889 = vmatprep.subr.mxu0 0.0
        %890 = vmatpush1.msra.mxu0 0.0
        %891 = vmatprep.subr.mxu0 0.0
        %892 = vmatpush1.msra.mxu0 0.0
        %893 = vmatprep.subr.mxu0 0.0
        %894 = vmatpush1.msra.mxu0 0.0
        %895 = vmatprep.mubr.f32.mxu0 0.0
        %896 = vmatmul.mubr.f32.gmra.mrb[0].mxu0 %v815
        %v897 = vpop.f32.mrb[0].mxu0
        %v898 = vadd.f32 0.0, %v897
        %v899 = vpop.f32.mrb[0].mxu0
        %900 = vmatprep.mubr.f32.mxu0 0.0
        %901 = vmatmul.mubr.f32.gmra.mrb[0].mxu0 %v816
        %v902 = vpop.f32.mrb[0].mxu0
        %v903 = vadd.f32 0.0, %v902
        %v904 = vpop.f32.mrb[0].mxu0
        %905 = vmatprep.mubr.f32.mxu0 0.0
        %906 = vmatmul.mubr.f32.gmra.mrb[0].mxu0 %v817
        %v907 = vpop.f32.mrb[0].mxu0
        %v908 = vadd.f32 0.0, %v907
        %v909 = vpop.f32.mrb[0].mxu0
        %910 = vmatprep.mubr.f32.mxu0 0.0
        %911 = vmatmul.mubr.f32.gmra.mrb[0].mxu0 %v818
        %v912 = vpop.f32.mrb[0].mxu0
        %v913 = vadd.f32 0.0, %v912
        %v914 = vpop.f32.mrb[0].mxu0
        %915 = vmatprep.mubr.f32.mxu0 0.0
        %916 = vmatmul.mubr.f32.gmra.mrb[0].mxu0 %v819
        %v917 = vpop.f32.mrb[0].mxu0
        %v918 = vadd.f32 0.0, %v917
        %v919 = vpop.f32.mrb[0].mxu0
        %920 = vmatprep.mubr.f32.mxu0 0.0
        %921 = vmatmul.mubr.f32.gmra.mrb[0].mxu0 %v820
        %v922 = vpop.f32.mrb[0].mxu0
        %v923 = vadd.f32 0.0, %v922
        %v924 = vpop.f32.mrb[0].mxu0
        %925 = vmatprep.mubr.f32.mxu0 0.0
        %926 = vmatmul.mubr.f32.gmra.mrb[0].mxu0 %v821
        %v927 = vpop.f32.mrb[0].mxu0
        %v928 = vadd.f32 0.0, %v927
        %v929 = vpop.f32.mrb[0].mxu0
        %930 = vmatprep.mubr.f32.mxu0 0.0
        %931 = vmatmul.mubr.f32.gmra.mrb[0].mxu0 %v822
        %v932 = vpop.f32.mrb[0].mxu0
        %v933 = vadd.f32 0.0, %v932
        %v934 = vpop.f32.mrb[0].mxu0
        %935 = vmatprep.mubr.f32.mxu0 0.0
        %936 = vmatmul.mubr.f32.gmra.mrb[0].mxu0 %v823
        %v937 = vpop.f32.mrb[0].mxu0
        %v938 = vadd.f32 0.0, %v937
        %v939 = vpop.f32.mrb[0].mxu0
        %940 = vmatprep.mubr.f32.mxu0 0.0
        %941 = vmatmul.mubr.f32.gmra.mrb[0].mxu0 %v824
        %v942 = vpop.f32.mrb[0].mxu0
        %v943 = vadd.f32 0.0, %v942
        %v944 = vpop.f32.mrb[0].mxu0
        %945 = vmatprep.mubr.f32.mxu0 0.0
        %946 = vmatmul.mubr.f32.gmra.mrb[0].mxu0 %v825
        %v947 = vpop.f32.mrb[0].mxu0
        %v948 = vadd.f32 0.0, %v947
        %v949 = vpop.f32.mrb[0].mxu0
        %950 = vmatprep.mubr.f32.mxu0 0.0
        %951 = vmatmul.mubr.f32.gmra.mrb[0].mxu0 %v826
        %v952 = vpop.f32.mrb[0].mxu0
        %v953 = vadd.f32 0.0, %v952
        %v954 = vpop.f32.mrb[0].mxu0
        %955 = vmatprep.mubr.f32.mxu0 0.0
        %956 = vmatmul.mubr.f32.gmra.mrb[0].mxu0 %v827
        %v957 = vpop.f32.mrb[0].mxu0
        %v958 = vadd.f32 0.0, %v957
        %v959 = vpop.f32.mrb[0].mxu0
        %960 = vmatprep.mubr.f32.mxu0 0.0
        %961 = vmatmul.mubr.f32.gmra.mrb[0].mxu0 %v828
        %v962 = vpop.f32.mrb[0].mxu0
        %v963 = vadd.f32 0.0, %v962
        %v964 = vpop.f32.mrb[0].mxu0
        %965 = vmatprep.mubr.f32.mxu0 0.0
        %966 = vmatmul.mubr.f32.gmra.mrb[0].mxu0 %v829
        %v967 = vpop.f32.mrb[0].mxu0
        %v968 = vadd.f32 0.0, %v967
        %v969 = vpop.f32.mrb[0].mxu0
        %970 = vmatprep.mubr.f32.mxu0 0.0
        %971 = vmatmul.mubr.f32.gmra.mrb[0].mxu0 %v830
        %v972 = vpop.f32.mrb[0].mxu0
        %v973 = vadd.f32 0.0, %v972
        %v974 = vpop.f32.mrb[0].mxu0
        %975 = vdwg.mxu0
        %v976 = vadd.f32 %v783, %v898
        %v977 = vadd.f32 %v784, %v903
        %v978 = vadd.f32 %v785, %v908
        %v979 = vadd.f32 %v786, %v913
        %v980 = vadd.f32 %v787, %v918
        %v981 = vadd.f32 %v788, %v923
        %v982 = vadd.f32 %v789, %v928
        %v983 = vadd.f32 %v790, %v933
        %v984 = vadd.f32 %v791, %v938
        %v985 = vadd.f32 %v792, %v943
        %v986 = vadd.f32 %v793, %v948
        %v987 = vadd.f32 %v794, %v953
        %v988 = vadd.f32 %v795, %v958
        %v989 = vadd.f32 %v796, %v963
        %v990 = vadd.f32 %v797, %v968
        %v991 = vadd.f32 %v798, %v973
        %vm992 = vcmask 15360
        %993 = vst.msk [vmem:[#allocation2] sm:$0xff] %vm992, %v976
        %994 = vst.msk [vmem:[#allocation2 + $0x8] sm:$0xff] %vm992, %v977
        %995 = vst.msk [vmem:[#allocation2 + $0x10] sm:$0xff] %vm992, %v978
        %996 = vst.msk [vmem:[#allocation2 + $0x18] sm:$0xff] %vm992, %v979
        %997 = vst.msk [vmem:[#allocation2 + $0x20] sm:$0xff] %vm992, %v980
        %998 = vst.msk [vmem:[#allocation2 + $0x28] sm:$0xff] %vm992, %v981
        %999 = vst.msk [vmem:[#allocation2 + $0x30] sm:$0xff] %vm992, %v982
        %1000 = vst.msk [vmem:[#allocation2 + $0x38] sm:$0xff] %vm992, %v983
        %1001 = vst.msk [vmem:[#allocation2 + $0x40] sm:$0xff] %vm992, %v984
        %1002 = vst.msk [vmem:[#allocation2 + $0x48] sm:$0xff] %vm992, %v985
        %1003 = vst.msk [vmem:[#allocation2 + $0x50] sm:$0xff] %vm992, %v986
        %1004 = vst.msk [vmem:[#allocation2 + $0x58] sm:$0xff] %vm992, %v987
        %1005 = vst.msk [vmem:[#allocation2 + $0x60] sm:$0xff] %vm992, %v988
        %1006 = vst.msk [vmem:[#allocation2 + $0x68] sm:$0xff] %vm992, %v989
        %1007 = vst.msk [vmem:[#allocation2 + $0x70] sm:$0xff] %vm992, %v990
        %1008 = vst.msk [vmem:[#allocation2 + $0x78] sm:$0xff] %vm992, %v991
        %p1009 = scmp.eq.s32.totalorder %s22, %s21
        // Predicated region
        $region90: #{tpu_custom_call.1} parent=80 // pred_check
          %p1010 = pneg %p1009
        $region91: #{tpu_custom_call.1} parent=80 // pred_check_branch
          %1012 = sbr.rel (%p1010) target = $region93
        $region92: #{tpu_custom_call.1} parent=80 // pred_region
          %v1013 = vld [vmem:[#allocation2] sm:$0xff]
          %v1014 = vld [vmem:[#allocation2 + $0x8] sm:$0xff]
          %v1015 = vld [vmem:[#allocation2 + $0x10] sm:$0xff]
          %v1016 = vld [vmem:[#allocation2 + $0x18] sm:$0xff]
          %v1017 = vld [vmem:[#allocation2 + $0x20] sm:$0xff]
          %v1018 = vld [vmem:[#allocation2 + $0x28] sm:$0xff]
          %v1019 = vld [vmem:[#allocation2 + $0x30] sm:$0xff]
          %v1020 = vld [vmem:[#allocation2 + $0x38] sm:$0xff]
          %v1021 = vld [vmem:[#allocation2 + $0x40] sm:$0xff]
          %v1022 = vld [vmem:[#allocation2 + $0x48] sm:$0xff]
          %v1023 = vld [vmem:[#allocation2 + $0x50] sm:$0xff]
          %v1024 = vld [vmem:[#allocation2 + $0x58] sm:$0xff]
          %v1025 = vld [vmem:[#allocation2 + $0x60] sm:$0xff]
          %v1026 = vld [vmem:[#allocation2 + $0x68] sm:$0xff]
          %v1027 = vld [vmem:[#allocation2 + $0x70] sm:$0xff]
          %v1028 = vld [vmem:[#allocation2 + $0x78] sm:$0xff]
          %v1029 = vadd.f32 %v1013, %v767
          %v1030 = vadd.f32 %v1014, %v768
          %v1031 = vadd.f32 %v1015, %v769
          %v1032 = vadd.f32 %v1016, %v770
          %v1033 = vadd.f32 %v1017, %v771
          %v1034 = vadd.f32 %v1018, %v772
          %v1035 = vadd.f32 %v1019, %v773
          %v1036 = vadd.f32 %v1020, %v774
          %v1037 = vadd.f32 %v1021, %v775
          %v1038 = vadd.f32 %v1022, %v776
          %v1039 = vadd.f32 %v1023, %v777
          %v1040 = vadd.f32 %v1024, %v778
          %v1041 = vadd.f32 %v1025, %v779
          %v1042 = vadd.f32 %v1026, %v780
          %v1043 = vadd.f32 %v1027, %v781
          %v1044 = vadd.f32 %v1028, %v782
          %1045 = vst.msk [vmem:[#allocation2] sm:$0xff] %vm992, %v1029
          %1046 = vst.msk [vmem:[#allocation2 + $0x8] sm:$0xff] %vm992, %v1030
          %1047 = vst.msk [vmem:[#allocation2 + $0x10] sm:$0xff] %vm992, %v1031
          %1048 = vst.msk [vmem:[#allocation2 + $0x18] sm:$0xff] %vm992, %v1032
          %1049 = vst.msk [vmem:[#allocation2 + $0x20] sm:$0xff] %vm992, %v1033
          %1050 = vst.msk [vmem:[#allocation2 + $0x28] sm:$0xff] %vm992, %v1034
          %1051 = vst.msk [vmem:[#allocation2 + $0x30] sm:$0xff] %vm992, %v1035
          %1052 = vst.msk [vmem:[#allocation2 + $0x38] sm:$0xff] %vm992, %v1036
          %1053 = vst.msk [vmem:[#allocation2 + $0x40] sm:$0xff] %vm992, %v1037
          %1054 = vst.msk [vmem:[#allocation2 + $0x48] sm:$0xff] %vm992, %v1038
          %1055 = vst.msk [vmem:[#allocation2 + $0x50] sm:$0xff] %vm992, %v1039
          %1056 = vst.msk [vmem:[#allocation2 + $0x58] sm:$0xff] %vm992, %v1040
          %1057 = vst.msk [vmem:[#allocation2 + $0x60] sm:$0xff] %vm992, %v1041
          %1058 = vst.msk [vmem:[#allocation2 + $0x68] sm:$0xff] %vm992, %v1042
          %1059 = vst.msk [vmem:[#allocation2 + $0x70] sm:$0xff] %vm992, %v1043
          %1060 = vst.msk [vmem:[#allocation2 + $0x78] sm:$0xff] %vm992, %v1044
        $region93: #{tpu_custom_call.1} parent=80 // pred_fallthru
          _
        %p1061 = scmp.eq.s32.totalorder %s22, 1
        // Predicated region
        $region94: #{tpu_custom_call.1} parent=80 // pred_check
          %p1062 = pneg %p1061
        $region95: #{tpu_custom_call.1} parent=80 // pred_check_branch
          %1064 = sbr.rel (%p1062) target = $region97
        $region96: #{tpu_custom_call.1} parent=80 // pred_region
          %v1065 = vld [vmem:[%s430] sm:$0xff]
          %v1066 = vld [vmem:[%s430 + $0x8] sm:$0xff]
          %v1067 = vld [vmem:[%s430 + $0x10] sm:$0xff]
          %v1068 = vld [vmem:[%s430 + $0x18] sm:$0xff]
          %v1069 = vld [vmem:[%s430 + $0x20] sm:$0xff]
          %v1070 = vld [vmem:[%s430 + $0x28] sm:$0xff]
          %v1071 = vld [vmem:[%s430 + $0x30] sm:$0xff]
          %v1072 = vld [vmem:[%s430 + $0x38] sm:$0xff]
          %v1073 = vld [vmem:[%s430 + $0x40] sm:$0xff]
          %v1074 = vld [vmem:[%s430 + $0x48] sm:$0xff]
          %v1075 = vld [vmem:[%s430 + $0x50] sm:$0xff]
          %v1076 = vld [vmem:[%s430 + $0x58] sm:$0xff]
          %v1077 = vld [vmem:[%s430 + $0x60] sm:$0xff]
          %v1078 = vld [vmem:[%s430 + $0x68] sm:$0xff]
          %v1079 = vld [vmem:[%s430 + $0x70] sm:$0xff]
          %v1080 = vld [vmem:[%s430 + $0x78] sm:$0xff]
          %v1081 = vld [vmem:[#allocation2] sm:$0xff]
          %v1082 = vld [vmem:[#allocation2 + $0x8] sm:$0xff]
          %v1083 = vld [vmem:[#allocation2 + $0x10] sm:$0xff]
          %v1084 = vld [vmem:[#allocation2 + $0x18] sm:$0xff]
          %v1085 = vld [vmem:[#allocation2 + $0x20] sm:$0xff]
          %v1086 = vld [vmem:[#allocation2 + $0x28] sm:$0xff]
          %v1087 = vld [vmem:[#allocation2 + $0x30] sm:$0xff]
          %v1088 = vld [vmem:[#allocation2 + $0x38] sm:$0xff]
          %v1089 = vld [vmem:[#allocation2 + $0x40] sm:$0xff]
          %v1090 = vld [vmem:[#allocation2 + $0x48] sm:$0xff]
          %v1091 = vld [vmem:[#allocation2 + $0x50] sm:$0xff]
          %v1092 = vld [vmem:[#allocation2 + $0x58] sm:$0xff]
          %v1093 = vld [vmem:[#allocation2 + $0x60] sm:$0xff]
          %v1094 = vld [vmem:[#allocation2 + $0x68] sm:$0xff]
          %v1095 = vld [vmem:[#allocation2 + $0x70] sm:$0xff]
          %v1096 = vld [vmem:[#allocation2 + $0x78] sm:$0xff]
          %1098 = vset.pattern.permute.xlu0 0
          %1099 = vperm.xlu0 %1098, %v1065
          %v1100 = vpop.permute.xlu0 %1099
          %1103 = vset.pattern.permute.xlu0 0
          %1104 = vperm.xlu0 %1103, %v1066
          %v1105 = vpop.permute.xlu0 %1104
          %1108 = vset.pattern.permute.xlu0 0
          %1109 = vperm.xlu0 %1108, %v1067
          %v1110 = vpop.permute.xlu0 %1109
          %1113 = vset.pattern.permute.xlu0 0
          %1114 = vperm.xlu0 %1113, %v1068
          %v1115 = vpop.permute.xlu0 %1114
          %1118 = vset.pattern.permute.xlu0 0
          %1119 = vperm.xlu0 %1118, %v1069
          %v1120 = vpop.permute.xlu0 %1119
          %1123 = vset.pattern.permute.xlu0 0
          %1124 = vperm.xlu0 %1123, %v1070
          %v1125 = vpop.permute.xlu0 %1124
          %1128 = vset.pattern.permute.xlu0 0
          %1129 = vperm.xlu0 %1128, %v1071
          %v1130 = vpop.permute.xlu0 %1129
          %1133 = vset.pattern.permute.xlu0 0
          %1134 = vperm.xlu0 %1133, %v1072
          %v1135 = vpop.permute.xlu0 %1134
          %1138 = vset.pattern.permute.xlu0 0
          %1139 = vperm.xlu0 %1138, %v1073
          %v1140 = vpop.permute.xlu0 %1139
          %1143 = vset.pattern.permute.xlu0 0
          %1144 = vperm.xlu0 %1143, %v1074
          %v1145 = vpop.permute.xlu0 %1144
          %1148 = vset.pattern.permute.xlu0 0
          %1149 = vperm.xlu0 %1148, %v1075
          %v1150 = vpop.permute.xlu0 %1149
          %1153 = vset.pattern.permute.xlu0 0
          %1154 = vperm.xlu0 %1153, %v1076
          %v1155 = vpop.permute.xlu0 %1154
          %1158 = vset.pattern.permute.xlu0 0
          %1159 = vperm.xlu0 %1158, %v1077
          %v1160 = vpop.permute.xlu0 %1159
          %1163 = vset.pattern.permute.xlu0 0
          %1164 = vperm.xlu0 %1163, %v1078
          %v1165 = vpop.permute.xlu0 %1164
          %1168 = vset.pattern.permute.xlu0 0
          %1169 = vperm.xlu0 %1168, %v1079
          %v1170 = vpop.permute.xlu0 %1169
          %1173 = vset.pattern.permute.xlu0 0
          %1174 = vperm.xlu0 %1173, %v1080
          %v1175 = vpop.permute.xlu0 %1174
          %v1177 = vmul.f32 %v1100, %v1081
          %v1178 = vmul.f32 %v1105, %v1082
          %v1179 = vmul.f32 %v1110, %v1083
          %v1180 = vmul.f32 %v1115, %v1084
          %v1181 = vmul.f32 %v1120, %v1085
          %v1182 = vmul.f32 %v1125, %v1086
          %v1183 = vmul.f32 %v1130, %v1087
          %v1184 = vmul.f32 %v1135, %v1088
          %v1185 = vmul.f32 %v1140, %v1089
          %v1186 = vmul.f32 %v1145, %v1090
          %v1187 = vmul.f32 %v1150, %v1091
          %v1188 = vmul.f32 %v1155, %v1092
          %v1189 = vmul.f32 %v1160, %v1093
          %v1190 = vmul.f32 %v1165, %v1094
          %v1191 = vmul.f32 %v1170, %v1095
          %v1192 = vmul.f32 %v1175, %v1096
          %v1193 = vld [vmem:[%s5] sm:$0x1]
          %v1195 = vlaneseq
          %v1196 = vshrl.u32 %v1195, 7
          %v1197 = vsub.s32 0, %v1196
          %v1198 = vrot.slane %v1193, %v1197
          %v1200 = vadd.f32 %v1177, %v1198
          %v1201 = vadd.f32 %v1178, %v1198
          %v1202 = vadd.f32 %v1179, %v1198
          %v1203 = vadd.f32 %v1180, %v1198
          %v1204 = vadd.f32 %v1181, %v1198
          %v1205 = vadd.f32 %v1182, %v1198
          %v1206 = vadd.f32 %v1183, %v1198
          %v1207 = vadd.f32 %v1184, %v1198
          %v1208 = vadd.f32 %v1185, %v1198
          %v1209 = vadd.f32 %v1186, %v1198
          %v1210 = vadd.f32 %v1187, %v1198
          %v1211 = vadd.f32 %v1188, %v1198
          %v1212 = vadd.f32 %v1189, %v1198
          %v1213 = vadd.f32 %v1190, %v1198
          %v1214 = vadd.f32 %v1191, %v1198
          %v1215 = vadd.f32 %v1192, %v1198
          %v1216 = vsel %vm992, %v1200, -inf
          %1217 = vmax.xlane.f32.xlu0 %v1216
          %v1218 = vpop.xlane.xlu0 %1217
          %v1219 = vsel %vm992, %v1201, -inf
          %1220 = vmax.xlane.f32.xlu0 %v1219
          %v1221 = vpop.xlane.xlu0 %1220
          %v1222 = vsel %vm992, %v1202, -inf
          %1223 = vmax.xlane.f32.xlu0 %v1222
          %v1224 = vpop.xlane.xlu0 %1223
          %v1225 = vsel %vm992, %v1203, -inf
          %1226 = vmax.xlane.f32.xlu0 %v1225
          %v1227 = vpop.xlane.xlu0 %1226
          %v1228 = vsel %vm992, %v1204, -inf
          %1229 = vmax.xlane.f32.xlu0 %v1228
          %v1230 = vpop.xlane.xlu0 %1229
          %v1231 = vsel %vm992, %v1205, -inf
          %1232 = vmax.xlane.f32.xlu0 %v1231
          %v1233 = vpop.xlane.xlu0 %1232
          %v1234 = vsel %vm992, %v1206, -inf
          %1235 = vmax.xlane.f32.xlu0 %v1234
          %v1236 = vpop.xlane.xlu0 %1235
          %v1237 = vsel %vm992, %v1207, -inf
          %1238 = vmax.xlane.f32.xlu0 %v1237
          %v1239 = vpop.xlane.xlu0 %1238
          %v1240 = vsel %vm992, %v1208, -inf
          %1241 = vmax.xlane.f32.xlu0 %v1240
          %v1242 = vpop.xlane.xlu0 %1241
          %v1243 = vsel %vm992, %v1209, -inf
          %1244 = vmax.xlane.f32.xlu0 %v1243
          %v1245 = vpop.xlane.xlu0 %1244
          %v1246 = vsel %vm992, %v1210, -inf
          %1247 = vmax.xlane.f32.xlu0 %v1246
          %v1248 = vpop.xlane.xlu0 %1247
          %v1249 = vsel %vm992, %v1211, -inf
          %1250 = vmax.xlane.f32.xlu0 %v1249
          %v1251 = vpop.xlane.xlu0 %1250
          %v1252 = vsel %vm992, %v1212, -inf
          %1253 = vmax.xlane.f32.xlu0 %v1252
          %v1254 = vpop.xlane.xlu0 %1253
          %v1255 = vsel %vm992, %v1213, -inf
          %1256 = vmax.xlane.f32.xlu0 %v1255
          %v1257 = vpop.xlane.xlu0 %1256
          %v1258 = vsel %vm992, %v1214, -inf
          %1259 = vmax.xlane.f32.xlu0 %v1258
          %v1260 = vpop.xlane.xlu0 %1259
          %v1261 = vsel %vm992, %v1215, -inf
          %1262 = vmax.xlane.f32.xlu0 %v1261
          %v1263 = vpop.xlane.xlu0 %1262
          %v1264 = vsub.f32 %v1200, %v1218
          %v1265 = vsub.f32 %v1201, %v1221
          %v1266 = vsub.f32 %v1202, %v1224
          %v1267 = vsub.f32 %v1203, %v1227
          %v1268 = vsub.f32 %v1204, %v1230
          %v1269 = vsub.f32 %v1205, %v1233
          %v1270 = vsub.f32 %v1206, %v1236
          %v1271 = vsub.f32 %v1207, %v1239
          %v1272 = vsub.f32 %v1208, %v1242
          %v1273 = vsub.f32 %v1209, %v1245
          %v1274 = vsub.f32 %v1210, %v1248
          %v1275 = vsub.f32 %v1211, %v1251
          %v1276 = vsub.f32 %v1212, %v1254
          %v1277 = vsub.f32 %v1213, %v1257
          %v1278 = vsub.f32 %v1214, %v1260
          %v1279 = vsub.f32 %v1215, %v1263
          %v1280 = vmul.f32 %v1264, 1.442695
          %v1281 = vpow.pop %v1280
          %v1282 = vmul.f32 %v1265, 1.442695
          %v1283 = vpow.pop %v1282
          %v1284 = vmul.f32 %v1266, 1.442695
          %v1285 = vpow.pop %v1284
          %v1286 = vmul.f32 %v1267, 1.442695
          %v1287 = vpow.pop %v1286
          %v1288 = vmul.f32 %v1268, 1.442695
          %v1289 = vpow.pop %v1288
          %v1290 = vmul.f32 %v1269, 1.442695
          %v1291 = vpow.pop %v1290
          %v1292 = vmul.f32 %v1270, 1.442695
          %v1293 = vpow.pop %v1292
          %v1294 = vmul.f32 %v1271, 1.442695
          %v1295 = vpow.pop %v1294
          %v1296 = vmul.f32 %v1272, 1.442695
          %v1297 = vpow.pop %v1296
          %v1298 = vmul.f32 %v1273, 1.442695
          %v1299 = vpow.pop %v1298
          %v1300 = vmul.f32 %v1274, 1.442695
          %v1301 = vpow.pop %v1300
          %v1302 = vmul.f32 %v1275, 1.442695
          %v1303 = vpow.pop %v1302
          %v1304 = vmul.f32 %v1276, 1.442695
          %v1305 = vpow.pop %v1304
          %v1306 = vmul.f32 %v1277, 1.442695
          %v1307 = vpow.pop %v1306
          %v1308 = vmul.f32 %v1278, 1.442695
          %v1309 = vpow.pop %v1308
          %v1310 = vmul.f32 %v1279, 1.442695
          %v1311 = vpow.pop %v1310
          %v1312 = vsel %vm992, %v1281, 0.0
          %1313 = vadd.xlane.f32.xlu0 %v1312
          %v1314 = vpop.xlane.xlu0 %1313
          %v1315 = vsel %vm992, %v1283, 0.0
          %1316 = vadd.xlane.f32.xlu0 %v1315
          %v1317 = vpop.xlane.xlu0 %1316
          %v1318 = vsel %vm992, %v1285, 0.0
          %1319 = vadd.xlane.f32.xlu0 %v1318
          %v1320 = vpop.xlane.xlu0 %1319
          %v1321 = vsel %vm992, %v1287, 0.0
          %1322 = vadd.xlane.f32.xlu0 %v1321
          %v1323 = vpop.xlane.xlu0 %1322
          %v1324 = vsel %vm992, %v1289, 0.0
          %1325 = vadd.xlane.f32.xlu0 %v1324
          %v1326 = vpop.xlane.xlu0 %1325
          %v1327 = vsel %vm992, %v1291, 0.0
          %1328 = vadd.xlane.f32.xlu0 %v1327
          %v1329 = vpop.xlane.xlu0 %1328
          %v1330 = vsel %vm992, %v1293, 0.0
          %1331 = vadd.xlane.f32.xlu0 %v1330
          %v1332 = vpop.xlane.xlu0 %1331
          %v1333 = vsel %vm992, %v1295, 0.0
          %1334 = vadd.xlane.f32.xlu0 %v1333
          %v1335 = vpop.xlane.xlu0 %1334
          %v1336 = vsel %vm992, %v1297, 0.0
          %1337 = vadd.xlane.f32.xlu0 %v1336
          %v1338 = vpop.xlane.xlu0 %1337
          %v1339 = vsel %vm992, %v1299, 0.0
          %1340 = vadd.xlane.f32.xlu0 %v1339
          %v1341 = vpop.xlane.xlu0 %1340
          %v1342 = vsel %vm992, %v1301, 0.0
          %1343 = vadd.xlane.f32.xlu0 %v1342
          %v1344 = vpop.xlane.xlu0 %1343
          %v1345 = vsel %vm992, %v1303, 0.0
          %1346 = vadd.xlane.f32.xlu0 %v1345
          %v1347 = vpop.xlane.xlu0 %1346
          %v1348 = vsel %vm992, %v1305, 0.0
          %1349 = vadd.xlane.f32.xlu0 %v1348
          %v1350 = vpop.xlane.xlu0 %1349
          %v1351 = vsel %vm992, %v1307, 0.0
          %1352 = vadd.xlane.f32.xlu0 %v1351
          %v1353 = vpop.xlane.xlu0 %1352
          %v1354 = vsel %vm992, %v1309, 0.0
          %1355 = vadd.xlane.f32.xlu0 %v1354
          %v1356 = vpop.xlane.xlu0 %1355
          %v1357 = vsel %vm992, %v1311, 0.0
          %1358 = vadd.xlane.f32.xlu0 %v1357
          %v1359 = vpop.xlane.xlu0 %1358
          %v1360 = vlog2.pop %v1314
          %v1361 = vmul.f32 %v1360, 0.6931472
          %v1362 = vlog2.pop %v1317
          %v1363 = vmul.f32 %v1362, 0.6931472
          %v1364 = vlog2.pop %v1320
          %v1365 = vmul.f32 %v1364, 0.6931472
          %v1366 = vlog2.pop %v1323
          %v1367 = vmul.f32 %v1366, 0.6931472
          %v1368 = vlog2.pop %v1326
          %v1369 = vmul.f32 %v1368, 0.6931472
          %v1370 = vlog2.pop %v1329
          %v1371 = vmul.f32 %v1370, 0.6931472
          %v1372 = vlog2.pop %v1332
          %v1373 = vmul.f32 %v1372, 0.6931472
          %v1374 = vlog2.pop %v1335
          %v1375 = vmul.f32 %v1374, 0.6931472
          %v1376 = vlog2.pop %v1338
          %v1377 = vmul.f32 %v1376, 0.6931472
          %v1378 = vlog2.pop %v1341
          %v1379 = vmul.f32 %v1378, 0.6931472
          %v1380 = vlog2.pop %v1344
          %v1381 = vmul.f32 %v1380, 0.6931472
          %v1382 = vlog2.pop %v1347
          %v1383 = vmul.f32 %v1382, 0.6931472
          %v1384 = vlog2.pop %v1350
          %v1385 = vmul.f32 %v1384, 0.6931472
          %v1386 = vlog2.pop %v1353
          %v1387 = vmul.f32 %v1386, 0.6931472
          %v1388 = vlog2.pop %v1356
          %v1389 = vmul.f32 %v1388, 0.6931472
          %v1390 = vlog2.pop %v1359
          %v1391 = vmul.f32 %v1390, 0.6931472
          %v1392 = vsub.f32 %v1264, %v1361
          %v1393 = vsub.f32 %v1265, %v1363
          %v1394 = vsub.f32 %v1266, %v1365
          %v1395 = vsub.f32 %v1267, %v1367
          %v1396 = vsub.f32 %v1268, %v1369
          %v1397 = vsub.f32 %v1269, %v1371
          %v1398 = vsub.f32 %v1270, %v1373
          %v1399 = vsub.f32 %v1271, %v1375
          %v1400 = vsub.f32 %v1272, %v1377
          %v1401 = vsub.f32 %v1273, %v1379
          %v1402 = vsub.f32 %v1274, %v1381
          %v1403 = vsub.f32 %v1275, %v1383
          %v1404 = vsub.f32 %v1276, %v1385
          %v1405 = vsub.f32 %v1277, %v1387
          %v1406 = vsub.f32 %v1278, %v1389
          %v1407 = vsub.f32 %v1279, %v1391
          %1408 = vst.msk [vmem:[%s436] sm:$0xff] %vm992, %v1392
          %1409 = vst.msk [vmem:[%s436 + $0x8] sm:$0xff] %vm992, %v1393
          %1410 = vst.msk [vmem:[%s436 + $0x10] sm:$0xff] %vm992, %v1394
          %1411 = vst.msk [vmem:[%s436 + $0x18] sm:$0xff] %vm992, %v1395
          %1412 = vst.msk [vmem:[%s436 + $0x20] sm:$0xff] %vm992, %v1396
          %1413 = vst.msk [vmem:[%s436 + $0x28] sm:$0xff] %vm992, %v1397
          %1414 = vst.msk [vmem:[%s436 + $0x30] sm:$0xff] %vm992, %v1398
          %1415 = vst.msk [vmem:[%s436 + $0x38] sm:$0xff] %vm992, %v1399
          %1416 = vst.msk [vmem:[%s436 + $0x40] sm:$0xff] %vm992, %v1400
          %1417 = vst.msk [vmem:[%s436 + $0x48] sm:$0xff] %vm992, %v1401
          %1418 = vst.msk [vmem:[%s436 + $0x50] sm:$0xff] %vm992, %v1402
          %1419 = vst.msk [vmem:[%s436 + $0x58] sm:$0xff] %vm992, %v1403
          %1420 = vst.msk [vmem:[%s436 + $0x60] sm:$0xff] %vm992, %v1404
          %1421 = vst.msk [vmem:[%s436 + $0x68] sm:$0xff] %vm992, %v1405
          %1422 = vst.msk [vmem:[%s436 + $0x70] sm:$0xff] %vm992, %v1406
          %1423 = vst.msk [vmem:[%s436 + $0x78] sm:$0xff] %vm992, %v1407
        $region97: #{tpu_custom_call.1} parent=80 // pred_fallthru
          _
        %s1424 = smul.u32 16, %s21
        %p1425 = scmp.lt.s32.totalorder %s1424, 31
        %s1426 = scalar_select %p1425, %s1424, 31
        %s1427 = smul.addr %s1426, 8
        %s1428 = scalar_lea.vmem %s6, %s1427
        // Predicated region
        $region98: #{tpu_custom_call.1} parent=80 // pred_check
          %p1429 = pneg %p195
        $region99: #{tpu_custom_call.1} parent=80 // pred_check_branch
          %1431 = sbr.rel (%p1429) target = $region101
        $region100: #{tpu_custom_call.1} parent=80 // pred_region
          %s1432 = smul.u32 16, %s21
        $region101: #{tpu_custom_call.1} parent=80 // pred_fallthru
          _
      $region81: #{tpu_custom_call.1} parent=5 // pred_fallthru
        _
      %p1433 = scmp.le.s32.totalorder 2, %s12
      // Predicated region
      $region102: #{tpu_custom_call.1} parent=5 // pred_check
        %p1434 = pneg %p1433
      $region103: #{tpu_custom_call.1} parent=5 // pred_check_branch
        %1436 = sbr.rel (%p1434) target = $region105
      $region104: #{tpu_custom_call.1} parent=5 // pred_region
        %s1437 = ssub.s32 %s12, 2
        // Predicated region
        $region106: #{tpu_custom_call.1} parent=104 // pred_check
          %p1438 = pneg %p201
        $region107: #{tpu_custom_call.1} parent=104 // pred_check_branch
          %1440 = sbr.rel (%p1438) target = $region109
        $region108: #{tpu_custom_call.1} parent=104 // pred_region
          %s1441 = smul.u32 16, %s23
          %p1442 = scmp.lt.s32.totalorder %s1441, 31
          %s1443 = scalar_select %p1442, %s1441, 31
          %s1444 = smul.addr %s1443, 8
          %s1445 = scalar_lea.vmem %s6, %s1444
        $region109: #{tpu_custom_call.1} parent=104 // pred_fallthru
          _
      $region105: #{tpu_custom_call.1} parent=5 // pred_fallthru
        _
    $region6: #{tpu_custom_call.1} parent=1 // loop_footer
      %s16 = sadd.s32 1, %s12
    $region7: #{tpu_custom_call.1} parent=1 // loop_footer_branch
      %11 = sbr.rel target = $region3
    $region8: #{tpu_custom_call.1} parent=1 // loop_exit
      _

</llo_original>
